<compile_context>
chip_gen: v7x
topology: tpu7x:2x2x1
jax: 0.10.0
libtpu: 0.0.40
codegen_flags: <defaults>
</compile_context>

<pallas_src>
import functools

import jax
import jax.numpy as jnp
from jax.experimental import pallas as pl
from jax.experimental.pallas import tpu as pltpu

K_IN = 28 * 28      # 784 (a multiple of 16, so bf16 sublane tiling of w1 is clean)
H1 = 512
H2 = 256
NEG_SLOPE = 0.01    # PyTorch nn.LeakyReLU default


def _round_up(n, m):
    return ((n + m - 1) // m) * m


def _leaky_relu(x, slope=NEG_SLOPE):
    return jnp.where(x > 0, x, slope * x)


def _discriminator_kernel(x_ref, w1_ref, b1_ref, w2_ref, b2_ref,
                          w3_ref, b3_ref, o_ref):
    x = x_ref[...]                                                   # [TB, 784] bf16

    # Layer 1: bf16 MXU matmul (K = 784), f32 accumulation; bias/LeakyReLU in
    # f32 (keeps v5e's f32-only VPU happy).
    h1 = jnp.dot(x, w1_ref[...],
                 preferred_element_type=jnp.float32) + b1_ref[...]   # [TB, 512]
    h1 = _leaky_relu(h1)

    # Layer 2: bf16 MXU matmul, f32 accumulation.
    h2 = jnp.dot(h1.astype(jnp.bfloat16), w2_ref[...],
                 preferred_element_type=jnp.float32) + b2_ref[...]   # [TB, 256]
    h2 = _leaky_relu(h2)

    # Layer 3 (out_features = 1): VPU multiply + XLU row-reduce instead of a
    # 1-column MXU matmul (avoids <1% MXU utilization + lane-1 MXU output).
    h3 = jnp.sum(h2 * w3_ref[...], axis=-1, keepdims=True) + b3_ref[...]  # [TB, 1]

    # Sigmoid on the otherwise-idle EUP.  Clamp the exponent so exp() stays
    # finite even for very negative h3 (sigmoid(-30) ~ 1e-13 ~ 0), then
    # exp + approximate reciprocal (no f32 divide).
    z = jnp.exp(jnp.minimum(-h3, 30.0))
    o_ref[...] = pl.reciprocal(1.0 + z, approx=True)


def prepare_params(raw_params):
    """Convert PyTorch-layout f32 params into kernel layout:
    w1/w2 cast to bf16 (x @ W layout, no K padding), w3 kept f32 as a [1, 256]
    row (used on the VPU), biases f32 [1, out]."""
    w1, b1, w2, b2, w3, b3 = raw_params
    return (w1.astype(jnp.bfloat16),                     # [784, 512]
            b1.reshape(1, H1).astype(jnp.float32),
            w2.astype(jnp.bfloat16),                     # [512, 256]
            b2.reshape(1, H2).astype(jnp.float32),
            w3.reshape(1, H2).astype(jnp.float32),
            b3.reshape(1, 1).astype(jnp.float32))


def _choose_tile(batch, tb):
    """Batch tile: multiple of 16 (bf16 sublane packing), at most `tb`, and
    small enough that the grid has >= 2 steps when the batch allows it so
    v7x's two TensorCores both get work on the "parallel" batch axis."""
    if batch <= 16:
        return _round_up(batch, 8)          # single block == full array
    return max(16, min(tb, _round_up(pl.cdiv(batch, 2), 16)))


@functools.partial(jax.jit, static_argnames=("tb",))
def discriminator_forward(x, prepared_params, *, tb=512):
    """x: any shape with 28*28 trailing elements per sample (e.g. [B,1,28,28]).
    jit'ed so the reshape / bf16 cast / tail pad fuse into one XLA pass;
    feeding bf16 x directly avoids even that convert."""
    w1, b1, w2, b2, w3_row, b3 = prepared_params

    x2d = x.reshape(-1, K_IN).astype(jnp.bfloat16)   # bf16 x DMA: half the bytes
    B = x2d.shape[0]

    TB = _choose_tile(B, tb)
    Bp = _round_up(B, TB)
    if Bp != B:
        # Rows are independent; zero-pad the tail tile and slice back after.
        x2d = jnp.pad(x2d, ((0, Bp - B), (0, 0)))

    resident = lambda shape: pl.BlockSpec(shape, lambda i: (0, 0))

    out = pl.pallas_call(
        _discriminator_kernel,
        out_shape=jax.ShapeDtypeStruct((Bp, 1), jnp.float32),
        grid_spec=pltpu.PrefetchScalarGridSpec(
            num_scalar_prefetch=0,
            grid=(Bp // TB,),
            in_specs=[
                # x tile: last block dim == full array dim (784), so no dead
                # lanes are shipped over HBM; the batch axis is pipelined.
                pl.BlockSpec((TB, K_IN), lambda i: (i, 0)),
                resident((K_IN, H1)),   # w1 (bf16, VMEM-resident across steps)
                resident((1, H1)),      # b1
                resident((H1, H2)),     # w2 (bf16, VMEM-resident)
                resident((1, H2)),      # b2
                resident((1, H2)),      # w3 row (f32, used on the VPU)
                resident((1, 1)),       # b3
            ],
            out_specs=pl.BlockSpec((TB, 1), lambda i: (i, 0)),
        ),
        compiler_params=pltpu.CompilerParams(
            dimension_semantics=("parallel",),   # v7x: 2 TCs split the batch axis
        ),
    )(x2d, w1, b1, w2, b2, w3_row, b3)

    return out[:B]


def init_params(key):
    """Deterministic synthetic params matching nn.Linear shapes, stored as
    (in_features, out_features) for x @ W; biases as [1, out]."""
    k1, k2, k3 = jax.random.split(key, 3)

    def linear(k, fan_in, fan_out):
        bound = 1.0 / jnp.sqrt(jnp.float32(fan_in))
        kw, kb = jax.random.split(k)
        w = jax.random.uniform(kw, (fan_in, fan_out), jnp.float32, -bound, bound)
        b = jax.random.uniform(kb, (1, fan_out), jnp.float32, -bound, bound)
        return w, b

    w1, b1 = linear(k1, K_IN, H1)
    w2, b2 = linear(k2, H1, H2)
    w3, b3 = linear(k3, H2, 1)
    return (w1, b1, w2, b2, w3, b3)


def reference_forward(x, raw_params, *, mixed_precision):
    """Pure-JAX reference. mixed_precision=True mirrors the kernel's bf16
    matmul / f32-accumulate numerics; False is the exact f32 PyTorch math."""
    w1, b1, w2, b2, w3, b3 = raw_params
    h = x.reshape(-1, K_IN).astype(jnp.float32)
    if mixed_precision:
        h = _leaky_relu(jnp.dot(h.astype(jnp.bfloat16), w1.astype(jnp.bfloat16),
                                preferred_element_type=jnp.float32) + b1)
        h = _leaky_relu(jnp.dot(h.astype(jnp.bfloat16), w2.astype(jnp.bfloat16),
                                preferred_element_type=jnp.float32) + b2)
    else:
        h = _leaky_relu(h @ w1 + b1)
        h = _leaky_relu(h @ w2 + b2)
    return jax.nn.sigmoid(h @ w3 + b3)


if __name__ == "__main__":
    key = jax.random.PRNGKey(0)
    kx, kx2, kp = jax.random.split(key, 3)

    raw_params = init_params(kp)
    params = prepare_params(raw_params)

    # Small MNIST-like batch: [B, 1, 28, 28] (NCHW), flattened inside forward.
    B = 2
    x = jax.random.normal(kx, (B, 1, 28, 28), dtype=jnp.float32)
    out = jax.block_until_ready(discriminator_forward(x, params))
    assert out.shape == (B, 1), out.shape

    ref_mixed = reference_forward(x, raw_params, mixed_precision=True)
    ref_f32 = reference_forward(x, raw_params, mixed_precision=False)
    assert jnp.allclose(out, ref_mixed, atol=5e-3, rtol=5e-3), "mismatch vs bf16 reference"
    assert jnp.allclose(out, ref_f32, atol=5e-2, rtol=5e-2), "mismatch vs f32 reference"

    # Exercise the multi-step grid + tail-padding path (B=300 -> TB=160, 2 steps).
    B2 = 300
    x2 = jax.random.normal(kx2, (B2, 1, 28, 28), dtype=jnp.float32)
    out2 = jax.block_until_ready(discriminator_forward(x2, params))
    assert out2.shape == (B2, 1), out2.shape
    ref2 = reference_forward(x2, raw_params, mixed_precision=True)
    assert jnp.allclose(out2, ref2, atol=5e-3, rtol=5e-3), "mismatch on multi-tile batch"

    print("KERNEL_OK")
</pallas_src>

<mosaic_0001>
module attributes {stable_mosaic.version = 11 : i64} {
  func.func @_discriminator_kernel(%arg0: i32, %arg1: memref<8x784xbf16, #tpu.memory_space<vmem>>, %arg2: memref<784x512xbf16, #tpu.memory_space<vmem>>, %arg3: memref<1x512xf32, #tpu.memory_space<vmem>>, %arg4: memref<512x256xbf16, #tpu.memory_space<vmem>>, %arg5: memref<1x256xf32, #tpu.memory_space<vmem>>, %arg6: memref<1x256xf32, #tpu.memory_space<vmem>>, %arg7: memref<1x1xf32, #tpu.memory_space<vmem>>, %arg8: memref<8x1xf32, #tpu.memory_space<vmem>>) attributes {dimension_semantics = [#tpu.dimension_semantics<parallel>], iteration_bounds = array<i64: 1>, scalar_prefetch = 0 : i64, scratch_operands = 0 : i64, tpu.core_type = #tpu.core_type<tc>, window_params = [{transform_indices = @transform_0, window_bounds = array<i64: 8, 784>}, {pipeline_mode = #tpu.pipeline_mode<synchronous>, transform_indices = @transform_1, window_bounds = array<i64: 784, 512>}, {pipeline_mode = #tpu.pipeline_mode<synchronous>, transform_indices = @transform_2, window_bounds = array<i64: 1, 512>}, {pipeline_mode = #tpu.pipeline_mode<synchronous>, transform_indices = @transform_3, window_bounds = array<i64: 512, 256>}, {pipeline_mode = #tpu.pipeline_mode<synchronous>, transform_indices = @transform_4, window_bounds = array<i64: 1, 256>}, {pipeline_mode = #tpu.pipeline_mode<synchronous>, transform_indices = @transform_5, window_bounds = array<i64: 1, 256>}, {pipeline_mode = #tpu.pipeline_mode<synchronous>, transform_indices = @transform_6, window_bounds = array<i64: 1, 1>}, {transform_indices = @transform_7, window_bounds = array<i64: 8, 1>}]} {
    %c0 = arith.constant 0 : index
    %c0_0 = arith.constant 0 : index
    %0 = vector.load %arg1[%c0, %c0_0] : memref<8x784xbf16, #tpu.memory_space<vmem>>, vector<8x784xbf16>
    %c0_1 = arith.constant 0 : index
    %c0_2 = arith.constant 0 : index
    %1 = vector.load %arg2[%c0_1, %c0_2] : memref<784x512xbf16, #tpu.memory_space<vmem>>, vector<784x512xbf16>
    %cst = arith.constant dense<0.000000e+00> : vector<8x512xf32>
    %2 = tpu.matmul %0, %1, %cst {dimension_numbers = #tpu.dot_dimension_numbers<[1], [0], [0], [1], [0, 0, 1, 1], [], []>} : vector<8x784xbf16>, vector<784x512xbf16>, vector<8x512xf32> -> vector<8x512xf32>
    %c0_3 = arith.constant 0 : index
    %c0_4 = arith.constant 0 : index
    %3 = vector.load %arg3[%c0_3, %c0_4] : memref<1x512xf32, #tpu.memory_space<vmem>>, vector<1x512xf32>
    %4 = vector.broadcast %3 : vector<1x512xf32> to vector<8x512xf32>
    %5 = arith.addf %2, %4 : vector<8x512xf32>
    %cst_5 = arith.constant 0.000000e+00 : f32
    %6 = vector.broadcast %cst_5 : f32 to vector<8x512xf32>
    %7 = arith.cmpf ogt, %5, %6 : vector<8x512xf32>
    %cst_6 = arith.constant 0.00999999977 : f32
    %8 = vector.broadcast %cst_6 : f32 to vector<8x512xf32>
    %9 = arith.mulf %8, %5 : vector<8x512xf32>
    %10 = arith.select %7, %5, %9 : vector<8x512xi1>, vector<8x512xf32>
    %11 = arith.truncf %10 : vector<8x512xf32> to vector<8x512xbf16>
    %c0_7 = arith.constant 0 : index
    %c0_8 = arith.constant 0 : index
    %12 = vector.load %arg4[%c0_7, %c0_8] : memref<512x256xbf16, #tpu.memory_space<vmem>>, vector<512x256xbf16>
    %cst_9 = arith.constant dense<0.000000e+00> : vector<8x256xf32>
    %13 = tpu.matmul %11, %12, %cst_9 {dimension_numbers = #tpu.dot_dimension_numbers<[1], [0], [0], [1], [0, 0, 1, 1], [], []>} : vector<8x512xbf16>, vector<512x256xbf16>, vector<8x256xf32> -> vector<8x256xf32>
    %c0_10 = arith.constant 0 : index
    %c0_11 = arith.constant 0 : index
    %14 = vector.load %arg5[%c0_10, %c0_11] : memref<1x256xf32, #tpu.memory_space<vmem>>, vector<1x256xf32>
    %15 = vector.broadcast %14 : vector<1x256xf32> to vector<8x256xf32>
    %16 = arith.addf %13, %15 : vector<8x256xf32>
    %cst_12 = arith.constant 0.000000e+00 : f32
    %17 = vector.broadcast %cst_12 : f32 to vector<8x256xf32>
    %18 = arith.cmpf ogt, %16, %17 : vector<8x256xf32>
    %cst_13 = arith.constant 0.00999999977 : f32
    %19 = vector.broadcast %cst_13 : f32 to vector<8x256xf32>
    %20 = arith.mulf %19, %16 : vector<8x256xf32>
    %21 = arith.select %18, %16, %20 : vector<8x256xi1>, vector<8x256xf32>
    %c0_14 = arith.constant 0 : index
    %c0_15 = arith.constant 0 : index
    %22 = vector.load %arg6[%c0_14, %c0_15] : memref<1x256xf32, #tpu.memory_space<vmem>>, vector<1x256xf32>
    %23 = vector.broadcast %22 : vector<1x256xf32> to vector<8x256xf32>
    %24 = arith.mulf %21, %23 : vector<8x256xf32>
    %cst_16 = arith.constant dense<0.000000e+00> : vector<8xf32>
    %25 = vector.multi_reduction <add>, %24, %cst_16 [1] : vector<8x256xf32> to vector<8xf32>
    %26 = vector.shape_cast %25 : vector<8xf32> to vector<8x1xf32>
    %c0_17 = arith.constant 0 : index
    %c0_18 = arith.constant 0 : index
    %27 = vector.load %arg7[%c0_17, %c0_18] : memref<1x1xf32, #tpu.memory_space<vmem>>, vector<1x1xf32>
    %28 = vector.broadcast %27 : vector<1x1xf32> to vector<8x1xf32>
    %29 = arith.addf %26, %28 : vector<8x1xf32>
    %cst_19 = arith.constant 0.000000e+00 : f32
    %30 = vector.broadcast %cst_19 : f32 to vector<8x1xf32>
    %31 = arith.subf %30, %29 : vector<8x1xf32>
    %cst_20 = arith.constant 3.000000e+01 : f32
    %32 = vector.broadcast %cst_20 : f32 to vector<8x1xf32>
    %33 = arith.minimumf %31, %32 : vector<8x1xf32>
    %34 = math.exp %33 : vector<8x1xf32>
    %cst_21 = arith.constant 1.000000e+00 : f32
    %35 = vector.broadcast %cst_21 : f32 to vector<8x1xf32>
    %36 = arith.addf %35, %34 : vector<8x1xf32>
    %37 = tpu.reciprocal %36 {approx = true} : vector<8x1xf32> -> vector<8x1xf32>
    %c0_22 = arith.constant 0 : index
    %c0_23 = arith.constant 0 : index
    %38 = vector.load %arg8[%c0_22, %c0_23] : memref<8x1xf32, #tpu.memory_space<vmem>>, vector<8x1xf32>
    tpu.vector_store %arg8[%c0_22, %c0_23], %37 {strides = array<i32>} : memref<8x1xf32, #tpu.memory_space<vmem>>, vector<8x1xf32>,
    return
  }
  func.func @transform_0(%arg0: i32) -> (i32, i32) {
    %c0_i32 = arith.constant 0 : i32
    %c0_i32_0 = arith.constant 0 : i32
    return %arg0, %c0_i32 : i32, i32
  }
  func.func @transform_1(%arg0: i32) -> (i32, i32) {
    %c0_i32 = arith.constant 0 : i32
    %c0_i32_0 = arith.constant 0 : i32
    %c0_i32_1 = arith.constant 0 : i32
    return %c0_i32, %c0_i32_0 : i32, i32
  }
  func.func @transform_2(%arg0: i32) -> (i32, i32) {
    %c0_i32 = arith.constant 0 : i32
    %c0_i32_0 = arith.constant 0 : i32
    %c0_i32_1 = arith.constant 0 : i32
    return %c0_i32, %c0_i32_0 : i32, i32
  }
  func.func @transform_3(%arg0: i32) -> (i32, i32) {
    %c0_i32 = arith.constant 0 : i32
    %c0_i32_0 = arith.constant 0 : i32
    %c0_i32_1 = arith.constant 0 : i32
    return %c0_i32, %c0_i32_0 : i32, i32
  }
  func.func @transform_4(%arg0: i32) -> (i32, i32) {
    %c0_i32 = arith.constant 0 : i32
    %c0_i32_0 = arith.constant 0 : i32
    %c0_i32_1 = arith.constant 0 : i32
    return %c0_i32, %c0_i32_0 : i32, i32
  }
  func.func @transform_5(%arg0: i32) -> (i32, i32) {
    %c0_i32 = arith.constant 0 : i32
    %c0_i32_0 = arith.constant 0 : i32
    %c0_i32_1 = arith.constant 0 : i32
    return %c0_i32, %c0_i32_0 : i32, i32
  }
  func.func @transform_6(%arg0: i32) -> (i32, i32) {
    %c0_i32 = arith.constant 0 : i32
    %c0_i32_0 = arith.constant 0 : i32
    %c0_i32_1 = arith.constant 0 : i32
    return %c0_i32, %c0_i32_0 : i32, i32
  }
  func.func @transform_7(%arg0: i32) -> (i32, i32) {
    %c0_i32 = arith.constant 0 : i32
    %c0_i32_0 = arith.constant 0 : i32
    return %arg0, %c0_i32 : i32, i32
  }
}

</mosaic_0001>

<llo_original>
// kernel: discriminator_forward.1
$region0: #{discriminator_forward.1}
  #allocation0 [shape = 'u32[]', space=smem, size = 0x4, offset = 0x4, fixed_abs, tag = 'smem constant byte address 0x4 - core index']
  #allocation1 [shape = 'u32[144,128]{1,0:T(1,128)}', space=vmem, size = 0x12000, scoped, tag = 'internal scratch']
  #allocation2 [shape = 'f32[1,1]{1,0:T(1,128)S(1)}', space=vmem, size = 0x200, scoped, tag = 'scoped memory for discriminator_forward.1']
  %s0 = inlined_call_operand.vmem [shape: bf16[8,784], index: 0, kind: input, shape index: {}]
  %s1 = inlined_call_operand.hbm [shape: bf16[784,512], index: 1, kind: input, shape index: {}]
  %s2 = inlined_call_operand.vmem [shape: f32[1,512], index: 2, kind: input, shape index: {}]
  %s3 = inlined_call_operand.hbm [shape: bf16[512,256], index: 3, kind: input, shape index: {}]
  %s4 = inlined_call_operand.vmem [shape: f32[1,256], index: 4, kind: input, shape index: {}]
  %s5 = inlined_call_operand.vmem [shape: f32[1,256], index: 5, kind: input, shape index: {}]
  %s6 = inlined_call_operand.<no memory space> [shape: f32[1,1], index: 6, kind: input, shape index: {}]
  %s7 = inlined_call_operand.vmem [shape: f32[8,1], index: 7, kind: output, shape index: {}]
  %s8 = sld [smem:[#allocation0]]
  $region46: #{discriminator_forward.1} parent=0
    _
  %s10 = ssub.s32 1, %s8
  %s11 = scalar_select 0, %s10, %s8
  %v12 = vstv %s6
  %13 = vst [vmem:[#allocation2] sm:$0x1] %v12
  $region1: #{discriminator_forward.1} parent=0
    #allocation3 [shape = 'u8[802816]{0}', space=vmem, size = 0xc4000, scoped, tag = 'input window, operand 1, single buffered']
    #allocation4 [shape = 's32[1]{0}', space=sflag, size = 0x4, scoped, tag = 'scoped memory for discriminator_forward.1']
    #allocation5 [shape = 'u8[262144]{0}', space=vmem, size = 0x40000, scoped, tag = 'input window, operand 3, single buffered']
    #allocation6 [shape = 's32[1]{0}', space=sflag, size = 0x4, scoped, tag = 'scoped memory for discriminator_forward.1']
    %14 = vsyncpa [#allocation4], 0
    %15 = vsyncpa [#allocation6], 0
    // Predicated region
    $region2: #{discriminator_forward.1} parent=1 // pred_check
      _
    $region3: #{discriminator_forward.1} parent=1 // pred_check_branch
      %17 = sbr.rel (0) target = $region5
    $region4: #{discriminator_forward.1} parent=1 // pred_region
      _
    $region5: #{discriminator_forward.1} parent=1 // pred_fallthru
      _
    // Predicated region
    $region6: #{discriminator_forward.1} parent=1 // pred_check
      _
    $region7: #{discriminator_forward.1} parent=1 // pred_check_branch
      %19 = sbr.rel (0) target = $region9
    $region8: #{discriminator_forward.1} parent=1 // pred_region
      %s21 = ssub.s32 25088, 25088
      %22 = vsyncadd [#allocation4], %s21
      %s23 = sshll.u32 [#allocation3], 4
      %s24 = int_to_ptr.vmem [resolvable:$true] %s23
      %29 = dma.hbm_to_vmem [thread:$0]  %s1, 25088, %s24, [#allocation4], 256, 256, 16
    $region9: #{discriminator_forward.1} parent=1 // pred_fallthru
      _
    // Predicated region
    $region10: #{discriminator_forward.1} parent=1 // pred_check
      _
    $region11: #{discriminator_forward.1} parent=1 // pred_check_branch
      %31 = sbr.rel (0) target = $region13
    $region12: #{discriminator_forward.1} parent=1 // pred_region
      _
    $region13: #{discriminator_forward.1} parent=1 // pred_fallthru
      _
    // Predicated region
    $region14: #{discriminator_forward.1} parent=1 // pred_check
      _
    $region15: #{discriminator_forward.1} parent=1 // pred_check_branch
      %33 = sbr.rel (0) target = $region17
    $region16: #{discriminator_forward.1} parent=1 // pred_region
      %s35 = ssub.s32 8192, 8192
      %36 = vsyncadd [#allocation6], %s35
      %s37 = sshll.u32 [#allocation5], 4
      %s38 = int_to_ptr.vmem [resolvable:$true] %s37
      %43 = dma.hbm_to_vmem [thread:$0]  %s3, 8192, %s38, [#allocation6], 128, 128, 8
    $region17: #{discriminator_forward.1} parent=1 // pred_fallthru
      _
    // Predicated region
    $region18: #{discriminator_forward.1} parent=1 // pred_check
      _
    $region19: #{discriminator_forward.1} parent=1 // pred_check_branch
      %45 = sbr.rel (0) target = $region21
    $region20: #{discriminator_forward.1} parent=1 // pred_region
      _
    $region21: #{discriminator_forward.1} parent=1 // pred_fallthru
      _
    // Predicated region
    $region22: #{discriminator_forward.1} parent=1 // pred_check
      _
    $region23: #{discriminator_forward.1} parent=1 // pred_check_branch
      %47 = sbr.rel (0) target = $region25
    $region24: #{discriminator_forward.1} parent=1 // pred_region
      _
    $region25: #{discriminator_forward.1} parent=1 // pred_fallthru
      _
    // Predicated region
    $region26: #{discriminator_forward.1} parent=1 // pred_check
      _
    $region27: #{discriminator_forward.1} parent=1 // pred_check_branch
      %49 = sbr.rel (0) target = $region29
    $region28: #{discriminator_forward.1} parent=1 // pred_region
      _
    $region29: #{discriminator_forward.1} parent=1 // pred_fallthru
      _
    // Predicated region
    $region30: #{discriminator_forward.1} parent=1 // pred_check
      _
    $region31: #{discriminator_forward.1} parent=1 // pred_check_branch
      %51 = sbr.rel (0) target = $region33
    $region32: #{discriminator_forward.1} parent=1 // pred_region
      %52 = dma.done [#allocation4], 25088
    $region33: #{discriminator_forward.1} parent=1 // pred_fallthru
      _
    // Predicated region
    $region34: #{discriminator_forward.1} parent=1 // pred_check
      _
    $region35: #{discriminator_forward.1} parent=1 // pred_check_branch
      %54 = sbr.rel (0) target = $region37
    $region36: #{discriminator_forward.1} parent=1 // pred_region
      %55 = dma.done [#allocation6], 8192
    $region37: #{discriminator_forward.1} parent=1 // pred_fallthru
      _
    %v57 = vld [vmem:[%s0] sm:$0xff]
    %v58 = vld [vmem:[%s0 + $0x8] sm:$0xff]
    %v59 = vld [vmem:[%s0 + $0x10] sm:$0xff]
    %v60 = vld [vmem:[%s0 + $0x18] sm:$0xf]
    %v61 = vld [vmem:[#allocation3] sm:$0xff]
    %v62 = vld [vmem:[#allocation3 + $0x8] sm:$0xff]
    %v63 = vld [vmem:[#allocation3 + $0x10] sm:$0xff]
    %v64 = vld [vmem:[#allocation3 + $0x18] sm:$0xff]
    %v65 = vld [vmem:[#allocation3 + $0x20] sm:$0xff]
    %v66 = vld [vmem:[#allocation3 + $0x28] sm:$0xff]
    %v67 = vld [vmem:[#allocation3 + $0x30] sm:$0xff]
    %v68 = vld [vmem:[#allocation3 + $0x38] sm:$0xff]
    %v69 = vld [vmem:[#allocation3 + $0x40] sm:$0xff]
    %v70 = vld [vmem:[#allocation3 + $0x48] sm:$0xff]
    %v71 = vld [vmem:[#allocation3 + $0x50] sm:$0xff]
    %v72 = vld [vmem:[#allocation3 + $0x58] sm:$0xff]
    %v73 = vld [vmem:[#allocation3 + $0x60] sm:$0xff]
    %v74 = vld [vmem:[#allocation3 + $0x68] sm:$0xff]
    %v75 = vld [vmem:[#allocation3 + $0x70] sm:$0xff]
    %v76 = vld [vmem:[#allocation3 + $0x78] sm:$0xff]
    %v77 = vld [vmem:[#allocation3 + $0x80] sm:$0xff]
    %v78 = vld [vmem:[#allocation3 + $0x88] sm:$0xff]
    %v79 = vld [vmem:[#allocation3 + $0x90] sm:$0xff]
    %v80 = vld [vmem:[#allocation3 + $0x98] sm:$0xff]
    %v81 = vld [vmem:[#allocation3 + $0xa0] sm:$0xff]
    %v82 = vld [vmem:[#allocation3 + $0xa8] sm:$0xff]
    %v83 = vld [vmem:[#allocation3 + $0xb0] sm:$0xff]
    %v84 = vld [vmem:[#allocation3 + $0xb8] sm:$0xff]
    %v85 = vld [vmem:[#allocation3 + $0xc0] sm:$0xff]
    %v86 = vld [vmem:[#allocation3 + $0xc8] sm:$0xff]
    %v87 = vld [vmem:[#allocation3 + $0xd0] sm:$0xff]
    %v88 = vld [vmem:[#allocation3 + $0xd8] sm:$0xff]
    %v89 = vld [vmem:[#allocation3 + $0xe0] sm:$0xff]
    %v90 = vld [vmem:[#allocation3 + $0xe8] sm:$0xff]
    %v91 = vld [vmem:[#allocation3 + $0xf0] sm:$0xff]
    %v92 = vld [vmem:[#allocation3 + $0xf8] sm:$0xff]
    %v93 = vld [vmem:[#allocation3 + $0x100] sm:$0xff]
    %v94 = vld [vmem:[#allocation3 + $0x108] sm:$0xff]
    %v95 = vld [vmem:[#allocation3 + $0x110] sm:$0xff]
    %v96 = vld [vmem:[#allocation3 + $0x118] sm:$0xff]
    %v97 = vld [vmem:[#allocation3 + $0x120] sm:$0xff]
    %v98 = vld [vmem:[#allocation3 + $0x128] sm:$0xff]
    %v99 = vld [vmem:[#allocation3 + $0x130] sm:$0xff]
    %v100 = vld [vmem:[#allocation3 + $0x138] sm:$0xff]
    %v101 = vld [vmem:[#allocation3 + $0x140] sm:$0xff]
    %v102 = vld [vmem:[#allocation3 + $0x148] sm:$0xff]
    %v103 = vld [vmem:[#allocation3 + $0x150] sm:$0xff]
    %v104 = vld [vmem:[#allocation3 + $0x158] sm:$0xff]
    %v105 = vld [vmem:[#allocation3 + $0x160] sm:$0xff]
    %v106 = vld [vmem:[#allocation3 + $0x168] sm:$0xff]
    %v107 = vld [vmem:[#allocation3 + $0x170] sm:$0xff]
    %v108 = vld [vmem:[#allocation3 + $0x178] sm:$0xff]
    %v109 = vld [vmem:[#allocation3 + $0x180] sm:$0xff]
    %v110 = vld [vmem:[#allocation3 + $0x188] sm:$0xff]
    %v111 = vld [vmem:[#allocation3 + $0x190] sm:$0xff]
    %v112 = vld [vmem:[#allocation3 + $0x198] sm:$0xff]
    %v113 = vld [vmem:[#allocation3 + $0x1a0] sm:$0xff]
    %v114 = vld [vmem:[#allocation3 + $0x1a8] sm:$0xff]
    %v115 = vld [vmem:[#allocation3 + $0x1b0] sm:$0xff]
    %v116 = vld [vmem:[#allocation3 + $0x1b8] sm:$0xff]
    %v117 = vld [vmem:[#allocation3 + $0x1c0] sm:$0xff]
    %v118 = vld [vmem:[#allocation3 + $0x1c8] sm:$0xff]
    %v119 = vld [vmem:[#allocation3 + $0x1d0] sm:$0xff]
    %v120 = vld [vmem:[#allocation3 + $0x1d8] sm:$0xff]
    %v121 = vld [vmem:[#allocation3 + $0x1e0] sm:$0xff]
    %v122 = vld [vmem:[#allocation3 + $0x1e8] sm:$0xff]
    %v123 = vld [vmem:[#allocation3 + $0x1f0] sm:$0xff]
    %v124 = vld [vmem:[#allocation3 + $0x1f8] sm:$0xff]
    %v125 = vld [vmem:[#allocation3 + $0x200] sm:$0xff]
    %v126 = vld [vmem:[#allocation3 + $0x208] sm:$0xff]
    %v127 = vld [vmem:[#allocation3 + $0x210] sm:$0xff]
    %v128 = vld [vmem:[#allocation3 + $0x218] sm:$0xff]
    %v129 = vld [vmem:[#allocation3 + $0x220] sm:$0xff]
    %v130 = vld [vmem:[#allocation3 + $0x228] sm:$0xff]
    %v131 = vld [vmem:[#allocation3 + $0x230] sm:$0xff]
    %v132 = vld [vmem:[#allocation3 + $0x238] sm:$0xff]
    %v133 = vld [vmem:[#allocation3 + $0x240] sm:$0xff]
    %v134 = vld [vmem:[#allocation3 + $0x248] sm:$0xff]
    %v135 = vld [vmem:[#allocation3 + $0x250] sm:$0xff]
    %v136 = vld [vmem:[#allocation3 + $0x258] sm:$0xff]
    %v137 = vld [vmem:[#allocation3 + $0x260] sm:$0xff]
    %v138 = vld [vmem:[#allocation3 + $0x268] sm:$0xff]
    %v139 = vld [vmem:[#allocation3 + $0x270] sm:$0xff]
    %v140 = vld [vmem:[#allocation3 + $0x278] sm:$0xff]
    %v141 = vld [vmem:[#allocation3 + $0x280] sm:$0xff]
    %v142 = vld [vmem:[#allocation3 + $0x288] sm:$0xff]
    %v143 = vld [vmem:[#allocation3 + $0x290] sm:$0xff]
    %v144 = vld [vmem:[#allocation3 + $0x298] sm:$0xff]
    %v145 = vld [vmem:[#allocation3 + $0x2a0] sm:$0xff]
    %v146 = vld [vmem:[#allocation3 + $0x2a8] sm:$0xff]
    %v147 = vld [vmem:[#allocation3 + $0x2b0] sm:$0xff]
    %v148 = vld [vmem:[#allocation3 + $0x2b8] sm:$0xff]
    %v149 = vld [vmem:[#allocation3 + $0x2c0] sm:$0xff]
    %v150 = vld [vmem:[#allocation3 + $0x2c8] sm:$0xff]
    %v151 = vld [vmem:[#allocation3 + $0x2d0] sm:$0xff]
    %v152 = vld [vmem:[#allocation3 + $0x2d8] sm:$0xff]
    %v153 = vld [vmem:[#allocation3 + $0x2e0] sm:$0xff]
    %v154 = vld [vmem:[#allocation3 + $0x2e8] sm:$0xff]
    %v155 = vld [vmem:[#allocation3 + $0x2f0] sm:$0xff]
    %v156 = vld [vmem:[#allocation3 + $0x2f8] sm:$0xff]
    %v157 = vld [vmem:[#allocation3 + $0x300] sm:$0xff]
    %v158 = vld [vmem:[#allocation3 + $0x308] sm:$0xff]
    %v159 = vld [vmem:[#allocation3 + $0x310] sm:$0xff]
    %v160 = vld [vmem:[#allocation3 + $0x318] sm:$0xff]
    %v161 = vld [vmem:[#allocation3 + $0x320] sm:$0xff]
    %v162 = vld [vmem:[#allocation3 + $0x328] sm:$0xff]
    %v163 = vld [vmem:[#allocation3 + $0x330] sm:$0xff]
    %v164 = vld [vmem:[#allocation3 + $0x338] sm:$0xff]
    %v165 = vld [vmem:[#allocation3 + $0x340] sm:$0xff]
    %v166 = vld [vmem:[#allocation3 + $0x348] sm:$0xff]
    %v167 = vld [vmem:[#allocation3 + $0x350] sm:$0xff]
    %v168 = vld [vmem:[#allocation3 + $0x358] sm:$0xff]
    %v169 = vld [vmem:[#allocation3 + $0x360] sm:$0xff]
    %v170 = vld [vmem:[#allocation3 + $0x368] sm:$0xff]
    %v171 = vld [vmem:[#allocation3 + $0x370] sm:$0xff]
    %v172 = vld [vmem:[#allocation3 + $0x378] sm:$0xff]
    %v173 = vld [vmem:[#allocation3 + $0x380] sm:$0xff]
    %v174 = vld [vmem:[#allocation3 + $0x388] sm:$0xff]
    %v175 = vld [vmem:[#allocation3 + $0x390] sm:$0xff]
    %v176 = vld [vmem:[#allocation3 + $0x398] sm:$0xff]
    %v177 = vld [vmem:[#allocation3 + $0x3a0] sm:$0xff]
    %v178 = vld [vmem:[#allocation3 + $0x3a8] sm:$0xff]
    %v179 = vld [vmem:[#allocation3 + $0x3b0] sm:$0xff]
    %v180 = vld [vmem:[#allocation3 + $0x3b8] sm:$0xff]
    %v181 = vld [vmem:[#allocation3 + $0x3c0] sm:$0xff]
    %v182 = vld [vmem:[#allocation3 + $0x3c8] sm:$0xff]
    %v183 = vld [vmem:[#allocation3 + $0x3d0] sm:$0xff]
    %v184 = vld [vmem:[#allocation3 + $0x3d8] sm:$0xff]
    %v185 = vld [vmem:[#allocation3 + $0x3e0] sm:$0xff]
    %v186 = vld [vmem:[#allocation3 + $0x3e8] sm:$0xff]
    %v187 = vld [vmem:[#allocation3 + $0x3f0] sm:$0xff]
    %v188 = vld [vmem:[#allocation3 + $0x3f8] sm:$0xff]
    %v189 = vld [vmem:[#allocation3 + $0x400] sm:$0xff]
    %v190 = vld [vmem:[#allocation3 + $0x408] sm:$0xff]
    %v191 = vld [vmem:[#allocation3 + $0x410] sm:$0xff]
    %v192 = vld [vmem:[#allocation3 + $0x418] sm:$0xff]
    %v193 = vld [vmem:[#allocation3 + $0x420] sm:$0xff]
    %v194 = vld [vmem:[#allocation3 + $0x428] sm:$0xff]
    %v195 = vld [vmem:[#allocation3 + $0x430] sm:$0xff]
    %v196 = vld [vmem:[#allocation3 + $0x438] sm:$0xff]
    %v197 = vld [vmem:[#allocation3 + $0x440] sm:$0xff]
    %v198 = vld [vmem:[#allocation3 + $0x448] sm:$0xff]
    %v199 = vld [vmem:[#allocation3 + $0x450] sm:$0xff]
    %v200 = vld [vmem:[#allocation3 + $0x458] sm:$0xff]
    %v201 = vld [vmem:[#allocation3 + $0x460] sm:$0xff]
    %v202 = vld [vmem:[#allocation3 + $0x468] sm:$0xff]
    %v203 = vld [vmem:[#allocation3 + $0x470] sm:$0xff]
    %v204 = vld [vmem:[#allocation3 + $0x478] sm:$0xff]
    %v205 = vld [vmem:[#allocation3 + $0x480] sm:$0xff]
    %v206 = vld [vmem:[#allocation3 + $0x488] sm:$0xff]
    %v207 = vld [vmem:[#allocation3 + $0x490] sm:$0xff]
    %v208 = vld [vmem:[#allocation3 + $0x498] sm:$0xff]
    %v209 = vld [vmem:[#allocation3 + $0x4a0] sm:$0xff]
    %v210 = vld [vmem:[#allocation3 + $0x4a8] sm:$0xff]
    %v211 = vld [vmem:[#allocation3 + $0x4b0] sm:$0xff]
    %v212 = vld [vmem:[#allocation3 + $0x4b8] sm:$0xff]
    %v213 = vld [vmem:[#allocation3 + $0x4c0] sm:$0xff]
    %v214 = vld [vmem:[#allocation3 + $0x4c8] sm:$0xff]
    %v215 = vld [vmem:[#allocation3 + $0x4d0] sm:$0xff]
    %v216 = vld [vmem:[#allocation3 + $0x4d8] sm:$0xff]
    %v217 = vld [vmem:[#allocation3 + $0x4e0] sm:$0xff]
    %v218 = vld [vmem:[#allocation3 + $0x4e8] sm:$0xff]
    %v219 = vld [vmem:[#allocation3 + $0x4f0] sm:$0xff]
    %v220 = vld [vmem:[#allocation3 + $0x4f8] sm:$0xff]
    %v221 = vld [vmem:[#allocation3 + $0x500] sm:$0xff]
    %v222 = vld [vmem:[#allocation3 + $0x508] sm:$0xff]
    %v223 = vld [vmem:[#allocation3 + $0x510] sm:$0xff]
    %v224 = vld [vmem:[#allocation3 + $0x518] sm:$0xff]
    %v225 = vld [vmem:[#allocation3 + $0x520] sm:$0xff]
    %v226 = vld [vmem:[#allocation3 + $0x528] sm:$0xff]
    %v227 = vld [vmem:[#allocation3 + $0x530] sm:$0xff]
    %v228 = vld [vmem:[#allocation3 + $0x538] sm:$0xff]
    %v229 = vld [vmem:[#allocation3 + $0x540] sm:$0xff]
    %v230 = vld [vmem:[#allocation3 + $0x548] sm:$0xff]
    %v231 = vld [vmem:[#allocation3 + $0x550] sm:$0xff]
    %v232 = vld [vmem:[#allocation3 + $0x558] sm:$0xff]
    %v233 = vld [vmem:[#allocation3 + $0x560] sm:$0xff]
    %v234 = vld [vmem:[#allocation3 + $0x568] sm:$0xff]
    %v235 = vld [vmem:[#allocation3 + $0x570] sm:$0xff]
    %v236 = vld [vmem:[#allocation3 + $0x578] sm:$0xff]
    %v237 = vld [vmem:[#allocation3 + $0x580] sm:$0xff]
    %v238 = vld [vmem:[#allocation3 + $0x588] sm:$0xff]
    %v239 = vld [vmem:[#allocation3 + $0x590] sm:$0xff]
    %v240 = vld [vmem:[#allocation3 + $0x598] sm:$0xff]
    %v241 = vld [vmem:[#allocation3 + $0x5a0] sm:$0xff]
    %v242 = vld [vmem:[#allocation3 + $0x5a8] sm:$0xff]
    %v243 = vld [vmem:[#allocation3 + $0x5b0] sm:$0xff]
    %v244 = vld [vmem:[#allocation3 + $0x5b8] sm:$0xff]
    %v245 = vld [vmem:[#allocation3 + $0x5c0] sm:$0xff]
    %v246 = vld [vmem:[#allocation3 + $0x5c8] sm:$0xff]
    %v247 = vld [vmem:[#allocation3 + $0x5d0] sm:$0xff]
    %v248 = vld [vmem:[#allocation3 + $0x5d8] sm:$0xff]
    %v249 = vld [vmem:[#allocation3 + $0x5e0] sm:$0xff]
    %v250 = vld [vmem:[#allocation3 + $0x5e8] sm:$0xff]
    %v251 = vld [vmem:[#allocation3 + $0x5f0] sm:$0xff]
    %v252 = vld [vmem:[#allocation3 + $0x5f8] sm:$0xff]
    %v253 = vld [vmem:[#allocation3 + $0x600] sm:$0xff]
    %v254 = vld [vmem:[#allocation3 + $0x608] sm:$0xff]
    %v255 = vld [vmem:[#allocation3 + $0x610] sm:$0xff]
    %v256 = vld [vmem:[#allocation3 + $0x618] sm:$0xff]
    %v257 = vld [vmem:[%s2] sm:$0xf]
    %v259 = vlaneseq
    %v260 = vshrl.u32 %v259, 7
    %v261 = vsub.s32 0, %v260
    %v262 = vrot.slane %v257, %v261
    %v263 = vlaneseq
    %v264 = vshrl.u32 %v263, 7
    %v265 = vsub.s32 1, %v264
    %v266 = vrot.slane %v257, %v265
    %v267 = vlaneseq
    %v268 = vshrl.u32 %v267, 7
    %v269 = vsub.s32 2, %v268
    %v270 = vrot.slane %v257, %v269
    %v271 = vlaneseq
    %v272 = vshrl.u32 %v271, 7
    %v273 = vsub.s32 3, %v272
    %v274 = vrot.slane %v257, %v273
    %v283 = vunpack.c.l.b16 %v57
    %v284 = vunpack.c.h.b16 %v57
    %v285 = vunpack.c.l.b16 %v58
    %v286 = vunpack.c.h.b16 %v58
    %v287 = vunpack.c.l.b16 %v59
    %v288 = vunpack.c.h.b16 %v59
    %v289 = vunpack.c.l.b16 %v60
    %v290 = vpack.c.b16 %v283, %v283
    %v291 = vpack.c.b16 %v284, %v284
    %v292 = vpack.c.b16 %v285, %v285
    %v293 = vpack.c.b16 %v286, %v286
    %v294 = vpack.c.b16 %v287, %v287
    %v295 = vpack.c.b16 %v288, %v288
    %v296 = vpack.c.b16 %v289, %v289
    %v499 = vunpack.c.l.b16 %v61
    %v500 = vunpack.c.h.b16 %v61
    %v501 = vunpack.c.l.b16 %v62
    %v502 = vunpack.c.h.b16 %v62
    %v503 = vunpack.c.l.b16 %v63
    %v504 = vunpack.c.h.b16 %v63
    %v505 = vunpack.c.l.b16 %v64
    %v506 = vunpack.c.h.b16 %v64
    %v507 = vunpack.c.l.b16 %v65
    %v508 = vunpack.c.h.b16 %v65
    %v509 = vunpack.c.l.b16 %v66
    %v510 = vunpack.c.h.b16 %v66
    %v511 = vunpack.c.l.b16 %v67
    %v512 = vunpack.c.h.b16 %v67
    %v513 = vunpack.c.l.b16 %v68
    %v514 = vunpack.c.h.b16 %v68
    %v515 = vunpack.c.l.b16 %v69
    %v516 = vunpack.c.h.b16 %v69
    %v517 = vunpack.c.l.b16 %v70
    %v518 = vunpack.c.h.b16 %v70
    %v519 = vunpack.c.l.b16 %v71
    %v520 = vunpack.c.h.b16 %v71
    %v521 = vunpack.c.l.b16 %v72
    %v522 = vunpack.c.h.b16 %v72
    %v523 = vunpack.c.l.b16 %v73
    %v524 = vunpack.c.h.b16 %v73
    %v525 = vunpack.c.l.b16 %v74
    %v526 = vunpack.c.h.b16 %v74
    %v527 = vunpack.c.l.b16 %v75
    %v528 = vunpack.c.h.b16 %v75
    %v529 = vunpack.c.l.b16 %v76
    %v530 = vunpack.c.h.b16 %v76
    %v531 = vunpack.c.l.b16 %v77
    %v532 = vunpack.c.h.b16 %v77
    %v533 = vunpack.c.l.b16 %v78
    %v534 = vunpack.c.h.b16 %v78
    %v535 = vunpack.c.l.b16 %v79
    %v536 = vunpack.c.h.b16 %v79
    %v537 = vunpack.c.l.b16 %v80
    %v538 = vunpack.c.h.b16 %v80
    %v539 = vunpack.c.l.b16 %v81
    %v540 = vunpack.c.h.b16 %v81
    %v541 = vunpack.c.l.b16 %v82
    %v542 = vunpack.c.h.b16 %v82
    %v543 = vunpack.c.l.b16 %v83
    %v544 = vunpack.c.h.b16 %v83
    %v545 = vunpack.c.l.b16 %v84
    %v546 = vunpack.c.h.b16 %v84
    %v547 = vunpack.c.l.b16 %v85
    %v548 = vunpack.c.h.b16 %v85
    %v549 = vunpack.c.l.b16 %v86
    %v550 = vunpack.c.h.b16 %v86
    %v551 = vunpack.c.l.b16 %v87
    %v552 = vunpack.c.h.b16 %v87
    %v553 = vunpack.c.l.b16 %v88
    %v554 = vunpack.c.h.b16 %v88
    %v555 = vunpack.c.l.b16 %v89
    %v556 = vunpack.c.h.b16 %v89
    %v557 = vunpack.c.l.b16 %v90
    %v558 = vunpack.c.h.b16 %v90
    %v559 = vunpack.c.l.b16 %v91
    %v560 = vunpack.c.h.b16 %v91
    %v561 = vunpack.c.l.b16 %v92
    %v562 = vunpack.c.h.b16 %v92
    %v563 = vunpack.c.l.b16 %v93
    %v564 = vunpack.c.h.b16 %v93
    %v565 = vunpack.c.l.b16 %v94
    %v566 = vunpack.c.h.b16 %v94
    %v567 = vunpack.c.l.b16 %v95
    %v568 = vunpack.c.h.b16 %v95
    %v569 = vunpack.c.l.b16 %v96
    %v570 = vunpack.c.h.b16 %v96
    %v571 = vunpack.c.l.b16 %v97
    %v572 = vunpack.c.h.b16 %v97
    %v573 = vunpack.c.l.b16 %v98
    %v574 = vunpack.c.h.b16 %v98
    %v575 = vunpack.c.l.b16 %v99
    %v576 = vunpack.c.h.b16 %v99
    %v577 = vunpack.c.l.b16 %v100
    %v578 = vunpack.c.h.b16 %v100
    %v579 = vunpack.c.l.b16 %v101
    %v580 = vunpack.c.h.b16 %v101
    %v581 = vunpack.c.l.b16 %v102
    %v582 = vunpack.c.h.b16 %v102
    %v583 = vunpack.c.l.b16 %v103
    %v584 = vunpack.c.h.b16 %v103
    %v585 = vunpack.c.l.b16 %v104
    %v586 = vunpack.c.h.b16 %v104
    %v587 = vunpack.c.l.b16 %v105
    %v588 = vunpack.c.h.b16 %v105
    %v589 = vunpack.c.l.b16 %v106
    %v590 = vunpack.c.h.b16 %v106
    %v591 = vunpack.c.l.b16 %v107
    %v592 = vunpack.c.h.b16 %v107
    %v593 = vunpack.c.l.b16 %v108
    %v594 = vunpack.c.h.b16 %v108
    %v595 = vunpack.c.l.b16 %v109
    %v596 = vunpack.c.h.b16 %v109
    %v597 = vunpack.c.l.b16 %v110
    %v598 = vunpack.c.h.b16 %v110
    %v599 = vunpack.c.l.b16 %v111
    %v600 = vunpack.c.h.b16 %v111
    %v601 = vunpack.c.l.b16 %v112
    %v602 = vunpack.c.h.b16 %v112
    %v603 = vunpack.c.l.b16 %v113
    %v604 = vunpack.c.h.b16 %v113
    %v605 = vunpack.c.l.b16 %v114
    %v606 = vunpack.c.h.b16 %v114
    %v607 = vunpack.c.l.b16 %v115
    %v608 = vunpack.c.h.b16 %v115
    %v609 = vunpack.c.l.b16 %v116
    %v610 = vunpack.c.h.b16 %v116
    %v611 = vunpack.c.l.b16 %v117
    %v612 = vunpack.c.h.b16 %v117
    %v613 = vunpack.c.l.b16 %v118
    %v614 = vunpack.c.h.b16 %v118
    %v615 = vunpack.c.l.b16 %v119
    %v616 = vunpack.c.h.b16 %v119
    %v617 = vunpack.c.l.b16 %v120
    %v618 = vunpack.c.h.b16 %v120
    %v619 = vunpack.c.l.b16 %v121
    %v620 = vunpack.c.h.b16 %v121
    %v621 = vunpack.c.l.b16 %v122
    %v622 = vunpack.c.h.b16 %v122
    %v623 = vunpack.c.l.b16 %v123
    %v624 = vunpack.c.h.b16 %v123
    %v625 = vunpack.c.l.b16 %v124
    %v626 = vunpack.c.h.b16 %v124
    %v627 = vunpack.c.l.b16 %v125
    %v628 = vunpack.c.h.b16 %v125
    %v629 = vunpack.c.l.b16 %v126
    %v630 = vunpack.c.h.b16 %v126
    %v631 = vunpack.c.l.b16 %v127
    %v632 = vunpack.c.h.b16 %v127
    %v633 = vunpack.c.l.b16 %v128
    %v634 = vunpack.c.h.b16 %v128
    %v635 = vunpack.c.l.b16 %v129
    %v636 = vunpack.c.h.b16 %v129
    %v637 = vunpack.c.l.b16 %v130
    %v638 = vunpack.c.h.b16 %v130
    %v639 = vunpack.c.l.b16 %v131
    %v640 = vunpack.c.h.b16 %v131
    %v641 = vunpack.c.l.b16 %v132
    %v642 = vunpack.c.h.b16 %v132
    %v643 = vunpack.c.l.b16 %v133
    %v644 = vunpack.c.h.b16 %v133
    %v645 = vunpack.c.l.b16 %v134
    %v646 = vunpack.c.h.b16 %v134
    %v647 = vunpack.c.l.b16 %v135
    %v648 = vunpack.c.h.b16 %v135
    %v649 = vunpack.c.l.b16 %v136
    %v650 = vunpack.c.h.b16 %v136
    %v651 = vunpack.c.l.b16 %v137
    %v652 = vunpack.c.h.b16 %v137
    %v653 = vunpack.c.l.b16 %v138
    %v654 = vunpack.c.h.b16 %v138
    %v655 = vunpack.c.l.b16 %v139
    %v656 = vunpack.c.h.b16 %v139
    %v657 = vunpack.c.l.b16 %v140
    %v658 = vunpack.c.h.b16 %v140
    %v659 = vunpack.c.l.b16 %v141
    %v660 = vunpack.c.h.b16 %v141
    %v661 = vunpack.c.l.b16 %v142
    %v662 = vunpack.c.h.b16 %v142
    %v663 = vunpack.c.l.b16 %v143
    %v664 = vunpack.c.h.b16 %v143
    %v665 = vunpack.c.l.b16 %v144
    %v666 = vunpack.c.h.b16 %v144
    %v667 = vunpack.c.l.b16 %v145
    %v668 = vunpack.c.h.b16 %v145
    %v669 = vunpack.c.l.b16 %v146
    %v670 = vunpack.c.h.b16 %v146
    %v671 = vunpack.c.l.b16 %v147
    %v672 = vunpack.c.h.b16 %v147
    %v673 = vunpack.c.l.b16 %v148
    %v674 = vunpack.c.h.b16 %v148
    %v675 = vunpack.c.l.b16 %v149
    %v676 = vunpack.c.h.b16 %v149
    %v677 = vunpack.c.l.b16 %v150
    %v678 = vunpack.c.h.b16 %v150
    %v679 = vunpack.c.l.b16 %v151
    %v680 = vunpack.c.h.b16 %v151
    %v681 = vunpack.c.l.b16 %v152
    %v682 = vunpack.c.h.b16 %v152
    %v683 = vunpack.c.l.b16 %v153
    %v684 = vunpack.c.h.b16 %v153
    %v685 = vunpack.c.l.b16 %v154
    %v686 = vunpack.c.h.b16 %v154
    %v687 = vunpack.c.l.b16 %v155
    %v688 = vunpack.c.h.b16 %v155
    %v689 = vunpack.c.l.b16 %v156
    %v690 = vunpack.c.h.b16 %v156
    %v691 = vunpack.c.l.b16 %v157
    %v692 = vunpack.c.h.b16 %v157
    %v693 = vunpack.c.l.b16 %v158
    %v694 = vunpack.c.h.b16 %v158
    %v695 = vunpack.c.l.b16 %v159
    %v696 = vunpack.c.h.b16 %v159
    %v697 = vunpack.c.l.b16 %v160
    %v698 = vunpack.c.h.b16 %v160
    %v699 = vunpack.c.l.b16 %v161
    %v700 = vunpack.c.h.b16 %v161
    %v701 = vunpack.c.l.b16 %v162
    %v702 = vunpack.c.h.b16 %v162
    %v703 = vunpack.c.l.b16 %v163
    %v704 = vunpack.c.h.b16 %v163
    %v705 = vunpack.c.l.b16 %v164
    %v706 = vunpack.c.h.b16 %v164
    %v707 = vunpack.c.l.b16 %v165
    %v708 = vunpack.c.h.b16 %v165
    %v709 = vunpack.c.l.b16 %v166
    %v710 = vunpack.c.h.b16 %v166
    %v711 = vunpack.c.l.b16 %v167
    %v712 = vunpack.c.h.b16 %v167
    %v713 = vunpack.c.l.b16 %v168
    %v714 = vunpack.c.h.b16 %v168
    %v715 = vunpack.c.l.b16 %v169
    %v716 = vunpack.c.h.b16 %v169
    %v717 = vunpack.c.l.b16 %v170
    %v718 = vunpack.c.h.b16 %v170
    %v719 = vunpack.c.l.b16 %v171
    %v720 = vunpack.c.h.b16 %v171
    %v721 = vunpack.c.l.b16 %v172
    %v722 = vunpack.c.h.b16 %v172
    %v723 = vunpack.c.l.b16 %v173
    %v724 = vunpack.c.h.b16 %v173
    %v725 = vunpack.c.l.b16 %v174
    %v726 = vunpack.c.h.b16 %v174
    %v727 = vunpack.c.l.b16 %v175
    %v728 = vunpack.c.h.b16 %v175
    %v729 = vunpack.c.l.b16 %v176
    %v730 = vunpack.c.h.b16 %v176
    %v731 = vunpack.c.l.b16 %v177
    %v732 = vunpack.c.h.b16 %v177
    %v733 = vunpack.c.l.b16 %v178
    %v734 = vunpack.c.h.b16 %v178
    %v735 = vunpack.c.l.b16 %v179
    %v736 = vunpack.c.h.b16 %v179
    %v737 = vunpack.c.l.b16 %v180
    %v738 = vunpack.c.h.b16 %v180
    %v739 = vunpack.c.l.b16 %v181
    %v740 = vunpack.c.h.b16 %v181
    %v741 = vunpack.c.l.b16 %v182
    %v742 = vunpack.c.h.b16 %v182
    %v743 = vunpack.c.l.b16 %v183
    %v744 = vunpack.c.h.b16 %v183
    %v745 = vunpack.c.l.b16 %v184
    %v746 = vunpack.c.h.b16 %v184
    %v747 = vunpack.c.l.b16 %v185
    %v748 = vunpack.c.h.b16 %v185
    %v749 = vunpack.c.l.b16 %v186
    %v750 = vunpack.c.h.b16 %v186
    %v751 = vunpack.c.l.b16 %v187
    %v752 = vunpack.c.h.b16 %v187
    %v753 = vunpack.c.l.b16 %v188
    %v754 = vunpack.c.h.b16 %v188
    %v755 = vunpack.c.l.b16 %v189
    %v756 = vunpack.c.h.b16 %v189
    %v757 = vunpack.c.l.b16 %v190
    %v758 = vunpack.c.h.b16 %v190
    %v759 = vunpack.c.l.b16 %v191
    %v760 = vunpack.c.h.b16 %v191
    %v761 = vunpack.c.l.b16 %v192
    %v762 = vunpack.c.h.b16 %v192
    %v763 = vunpack.c.l.b16 %v193
    %v764 = vunpack.c.h.b16 %v193
    %v765 = vunpack.c.l.b16 %v194
    %v766 = vunpack.c.h.b16 %v194
    %v767 = vunpack.c.l.b16 %v195
    %v768 = vunpack.c.h.b16 %v195
    %v769 = vunpack.c.l.b16 %v196
    %v770 = vunpack.c.h.b16 %v196
    %v771 = vunpack.c.l.b16 %v197
    %v772 = vunpack.c.h.b16 %v197
    %v773 = vunpack.c.l.b16 %v198
    %v774 = vunpack.c.h.b16 %v198
    %v775 = vunpack.c.l.b16 %v199
    %v776 = vunpack.c.h.b16 %v199
    %v777 = vunpack.c.l.b16 %v200
    %v778 = vunpack.c.h.b16 %v200
    %v779 = vunpack.c.l.b16 %v201
    %v780 = vunpack.c.h.b16 %v201
    %v781 = vunpack.c.l.b16 %v202
    %v782 = vunpack.c.h.b16 %v202
    %v783 = vunpack.c.l.b16 %v203
    %v784 = vunpack.c.h.b16 %v203
    %v785 = vunpack.c.l.b16 %v204
    %v786 = vunpack.c.h.b16 %v204
    %v787 = vunpack.c.l.b16 %v205
    %v788 = vunpack.c.h.b16 %v205
    %v789 = vunpack.c.l.b16 %v206
    %v790 = vunpack.c.h.b16 %v206
    %v791 = vunpack.c.l.b16 %v207
    %v792 = vunpack.c.h.b16 %v207
    %v793 = vunpack.c.l.b16 %v208
    %v794 = vunpack.c.h.b16 %v208
    %v795 = vunpack.c.l.b16 %v209
    %v796 = vunpack.c.h.b16 %v209
    %v797 = vunpack.c.l.b16 %v210
    %v798 = vunpack.c.h.b16 %v210
    %v799 = vunpack.c.l.b16 %v211
    %v800 = vunpack.c.h.b16 %v211
    %v801 = vunpack.c.l.b16 %v212
    %v802 = vunpack.c.h.b16 %v212
    %v803 = vunpack.c.l.b16 %v213
    %v804 = vunpack.c.h.b16 %v213
    %v805 = vunpack.c.l.b16 %v214
    %v806 = vunpack.c.h.b16 %v214
    %v807 = vunpack.c.l.b16 %v215
    %v808 = vunpack.c.h.b16 %v215
    %v809 = vunpack.c.l.b16 %v216
    %v810 = vunpack.c.h.b16 %v216
    %v811 = vunpack.c.l.b16 %v217
    %v812 = vunpack.c.h.b16 %v217
    %v813 = vunpack.c.l.b16 %v218
    %v814 = vunpack.c.h.b16 %v218
    %v815 = vunpack.c.l.b16 %v219
    %v816 = vunpack.c.h.b16 %v219
    %v817 = vunpack.c.l.b16 %v220
    %v818 = vunpack.c.h.b16 %v220
    %v819 = vunpack.c.l.b16 %v221
    %v820 = vunpack.c.h.b16 %v221
    %v821 = vunpack.c.l.b16 %v222
    %v822 = vunpack.c.h.b16 %v222
    %v823 = vunpack.c.l.b16 %v223
    %v824 = vunpack.c.h.b16 %v223
    %v825 = vunpack.c.l.b16 %v224
    %v826 = vunpack.c.h.b16 %v224
    %v827 = vunpack.c.l.b16 %v225
    %v828 = vunpack.c.h.b16 %v225
    %v829 = vunpack.c.l.b16 %v226
    %v830 = vunpack.c.h.b16 %v226
    %v831 = vunpack.c.l.b16 %v227
    %v832 = vunpack.c.h.b16 %v227
    %v833 = vunpack.c.l.b16 %v228
    %v834 = vunpack.c.h.b16 %v228
    %v835 = vunpack.c.l.b16 %v229
    %v836 = vunpack.c.h.b16 %v229
    %v837 = vunpack.c.l.b16 %v230
    %v838 = vunpack.c.h.b16 %v230
    %v839 = vunpack.c.l.b16 %v231
    %v840 = vunpack.c.h.b16 %v231
    %v841 = vunpack.c.l.b16 %v232
    %v842 = vunpack.c.h.b16 %v232
    %v843 = vunpack.c.l.b16 %v233
    %v844 = vunpack.c.h.b16 %v233
    %v845 = vunpack.c.l.b16 %v234
    %v846 = vunpack.c.h.b16 %v234
    %v847 = vunpack.c.l.b16 %v235
    %v848 = vunpack.c.h.b16 %v235
    %v849 = vunpack.c.l.b16 %v236
    %v850 = vunpack.c.h.b16 %v236
    %v851 = vunpack.c.l.b16 %v237
    %v852 = vunpack.c.h.b16 %v237
    %v853 = vunpack.c.l.b16 %v238
    %v854 = vunpack.c.h.b16 %v238
    %v855 = vunpack.c.l.b16 %v239
    %v856 = vunpack.c.h.b16 %v239
    %v857 = vunpack.c.l.b16 %v240
    %v858 = vunpack.c.h.b16 %v240
    %v859 = vunpack.c.l.b16 %v241
    %v860 = vunpack.c.h.b16 %v241
    %v861 = vunpack.c.l.b16 %v242
    %v862 = vunpack.c.h.b16 %v242
    %v863 = vunpack.c.l.b16 %v243
    %v864 = vunpack.c.h.b16 %v243
    %v865 = vunpack.c.l.b16 %v244
    %v866 = vunpack.c.h.b16 %v244
    %v867 = vunpack.c.l.b16 %v245
    %v868 = vunpack.c.h.b16 %v245
    %v869 = vunpack.c.l.b16 %v246
    %v870 = vunpack.c.h.b16 %v246
    %v871 = vunpack.c.l.b16 %v247
    %v872 = vunpack.c.h.b16 %v247
    %v873 = vunpack.c.l.b16 %v248
    %v874 = vunpack.c.h.b16 %v248
    %v875 = vunpack.c.l.b16 %v249
    %v876 = vunpack.c.h.b16 %v249
    %v877 = vunpack.c.l.b16 %v250
    %v878 = vunpack.c.h.b16 %v250
    %v879 = vunpack.c.l.b16 %v251
    %v880 = vunpack.c.h.b16 %v251
    %v881 = vunpack.c.l.b16 %v252
    %v882 = vunpack.c.h.b16 %v252
    %v883 = vunpack.c.l.b16 %v253
    %v884 = vunpack.c.h.b16 %v253
    %v885 = vunpack.c.l.b16 %v254
    %v886 = vunpack.c.h.b16 %v254
    %v887 = vunpack.c.l.b16 %v255
    %v888 = vunpack.c.h.b16 %v255
    %v889 = vunpack.c.l.b16 %v256
    %v890 = vunpack.c.h.b16 %v256
    %v891 = vpack.c.b16 %v503, %v499
    %v892 = vpack.c.b16 %v504, %v500
    %v893 = vpack.c.b16 %v505, %v501
    %v894 = vpack.c.b16 %v506, %v502
    %v895 = vpack.c.b16 %v511, %v507
    %v896 = vpack.c.b16 %v512, %v508
    %v897 = vpack.c.b16 %v513, %v509
    %v898 = vpack.c.b16 %v514, %v510
    %v899 = vpack.c.b16 %v519, %v515
    %v900 = vpack.c.b16 %v520, %v516
    %v901 = vpack.c.b16 %v521, %v517
    %v902 = vpack.c.b16 %v522, %v518
    %v903 = vpack.c.b16 %v527, %v523
    %v904 = vpack.c.b16 %v528, %v524
    %v905 = vpack.c.b16 %v529, %v525
    %v906 = vpack.c.b16 %v530, %v526
    %v907 = vpack.c.b16 %v535, %v531
    %v908 = vpack.c.b16 %v536, %v532
    %v909 = vpack.c.b16 %v537, %v533
    %v910 = vpack.c.b16 %v538, %v534
    %v911 = vpack.c.b16 %v543, %v539
    %v912 = vpack.c.b16 %v544, %v540
    %v913 = vpack.c.b16 %v545, %v541
    %v914 = vpack.c.b16 %v546, %v542
    %v915 = vpack.c.b16 %v551, %v547
    %v916 = vpack.c.b16 %v552, %v548
    %v917 = vpack.c.b16 %v553, %v549
    %v918 = vpack.c.b16 %v554, %v550
    %v919 = vpack.c.b16 %v559, %v555
    %v920 = vpack.c.b16 %v560, %v556
    %v921 = vpack.c.b16 %v561, %v557
    %v922 = vpack.c.b16 %v562, %v558
    %v923 = vpack.c.b16 %v567, %v563
    %v924 = vpack.c.b16 %v568, %v564
    %v925 = vpack.c.b16 %v569, %v565
    %v926 = vpack.c.b16 %v570, %v566
    %v927 = vpack.c.b16 %v575, %v571
    %v928 = vpack.c.b16 %v576, %v572
    %v929 = vpack.c.b16 %v577, %v573
    %v930 = vpack.c.b16 %v578, %v574
    %v931 = vpack.c.b16 %v583, %v579
    %v932 = vpack.c.b16 %v584, %v580
    %v933 = vpack.c.b16 %v585, %v581
    %v934 = vpack.c.b16 %v586, %v582
    %v935 = vpack.c.b16 %v591, %v587
    %v936 = vpack.c.b16 %v592, %v588
    %v937 = vpack.c.b16 %v593, %v589
    %v938 = vpack.c.b16 %v594, %v590
    %v939 = vpack.c.b16 %v599, %v595
    %v940 = vpack.c.b16 %v600, %v596
    %v941 = vpack.c.b16 %v601, %v597
    %v942 = vpack.c.b16 %v602, %v598
    %v943 = vpack.c.b16 %v607, %v603
    %v944 = vpack.c.b16 %v608, %v604
    %v945 = vpack.c.b16 %v609, %v605
    %v946 = vpack.c.b16 %v610, %v606
    %v947 = vpack.c.b16 %v615, %v611
    %v948 = vpack.c.b16 %v616, %v612
    %v949 = vpack.c.b16 %v617, %v613
    %v950 = vpack.c.b16 %v618, %v614
    %v951 = vpack.c.b16 %v623, %v619
    %v952 = vpack.c.b16 %v624, %v620
    %v953 = vpack.c.b16 %v625, %v621
    %v954 = vpack.c.b16 %v626, %v622
    %v955 = vpack.c.b16 %v631, %v627
    %v956 = vpack.c.b16 %v632, %v628
    %v957 = vpack.c.b16 %v633, %v629
    %v958 = vpack.c.b16 %v634, %v630
    %v959 = vpack.c.b16 %v639, %v635
    %v960 = vpack.c.b16 %v640, %v636
    %v961 = vpack.c.b16 %v641, %v637
    %v962 = vpack.c.b16 %v642, %v638
    %v963 = vpack.c.b16 %v647, %v643
    %v964 = vpack.c.b16 %v648, %v644
    %v965 = vpack.c.b16 %v649, %v645
    %v966 = vpack.c.b16 %v650, %v646
    %v967 = vpack.c.b16 %v655, %v651
    %v968 = vpack.c.b16 %v656, %v652
    %v969 = vpack.c.b16 %v657, %v653
    %v970 = vpack.c.b16 %v658, %v654
    %v971 = vpack.c.b16 %v663, %v659
    %v972 = vpack.c.b16 %v664, %v660
    %v973 = vpack.c.b16 %v665, %v661
    %v974 = vpack.c.b16 %v666, %v662
    %v975 = vpack.c.b16 %v671, %v667
    %v976 = vpack.c.b16 %v672, %v668
    %v977 = vpack.c.b16 %v673, %v669
    %v978 = vpack.c.b16 %v674, %v670
    %v979 = vpack.c.b16 %v679, %v675
    %v980 = vpack.c.b16 %v680, %v676
    %v981 = vpack.c.b16 %v681, %v677
    %v982 = vpack.c.b16 %v682, %v678
    %v983 = vpack.c.b16 %v687, %v683
    %v984 = vpack.c.b16 %v688, %v684
    %v985 = vpack.c.b16 %v689, %v685
    %v986 = vpack.c.b16 %v690, %v686
    %v987 = vpack.c.b16 %v695, %v691
    %v988 = vpack.c.b16 %v696, %v692
    %v989 = vpack.c.b16 %v697, %v693
    %v990 = vpack.c.b16 %v698, %v694
    %v991 = vpack.c.b16 %v703, %v699
    %v992 = vpack.c.b16 %v704, %v700
    %v993 = vpack.c.b16 %v705, %v701
    %v994 = vpack.c.b16 %v706, %v702
    %v995 = vpack.c.b16 %v711, %v707
    %v996 = vpack.c.b16 %v712, %v708
    %v997 = vpack.c.b16 %v713, %v709
    %v998 = vpack.c.b16 %v714, %v710
    %v999 = vpack.c.b16 %v719, %v715
    %v1000 = vpack.c.b16 %v720, %v716
    %v1001 = vpack.c.b16 %v721, %v717
    %v1002 = vpack.c.b16 %v722, %v718
    %v1003 = vpack.c.b16 %v727, %v723
    %v1004 = vpack.c.b16 %v728, %v724
    %v1005 = vpack.c.b16 %v729, %v725
    %v1006 = vpack.c.b16 %v730, %v726
    %v1007 = vpack.c.b16 %v735, %v731
    %v1008 = vpack.c.b16 %v736, %v732
    %v1009 = vpack.c.b16 %v737, %v733
    %v1010 = vpack.c.b16 %v738, %v734
    %v1011 = vpack.c.b16 %v743, %v739
    %v1012 = vpack.c.b16 %v744, %v740
    %v1013 = vpack.c.b16 %v745, %v741
    %v1014 = vpack.c.b16 %v746, %v742
    %v1015 = vpack.c.b16 %v751, %v747
    %v1016 = vpack.c.b16 %v752, %v748
    %v1017 = vpack.c.b16 %v753, %v749
    %v1018 = vpack.c.b16 %v754, %v750
    %v1019 = vpack.c.b16 %v759, %v755
    %v1020 = vpack.c.b16 %v760, %v756
    %v1021 = vpack.c.b16 %v761, %v757
    %v1022 = vpack.c.b16 %v762, %v758
    %v1023 = vpack.c.b16 %v767, %v763
    %v1024 = vpack.c.b16 %v768, %v764
    %v1025 = vpack.c.b16 %v769, %v765
    %v1026 = vpack.c.b16 %v770, %v766
    %v1027 = vpack.c.b16 %v775, %v771
    %v1028 = vpack.c.b16 %v776, %v772
    %v1029 = vpack.c.b16 %v777, %v773
    %v1030 = vpack.c.b16 %v778, %v774
    %v1031 = vpack.c.b16 %v783, %v779
    %v1032 = vpack.c.b16 %v784, %v780
    %v1033 = vpack.c.b16 %v785, %v781
    %v1034 = vpack.c.b16 %v786, %v782
    %v1035 = vpack.c.b16 %v791, %v787
    %v1036 = vpack.c.b16 %v792, %v788
    %v1037 = vpack.c.b16 %v793, %v789
    %v1038 = vpack.c.b16 %v794, %v790
    %v1039 = vpack.c.b16 %v799, %v795
    %v1040 = vpack.c.b16 %v800, %v796
    %v1041 = vpack.c.b16 %v801, %v797
    %v1042 = vpack.c.b16 %v802, %v798
    %v1043 = vpack.c.b16 %v807, %v803
    %v1044 = vpack.c.b16 %v808, %v804
    %v1045 = vpack.c.b16 %v809, %v805
    %v1046 = vpack.c.b16 %v810, %v806
    %v1047 = vpack.c.b16 %v815, %v811
    %v1048 = vpack.c.b16 %v816, %v812
    %v1049 = vpack.c.b16 %v817, %v813
    %v1050 = vpack.c.b16 %v818, %v814
    %v1051 = vpack.c.b16 %v823, %v819
    %v1052 = vpack.c.b16 %v824, %v820
    %v1053 = vpack.c.b16 %v825, %v821
    %v1054 = vpack.c.b16 %v826, %v822
    %v1055 = vpack.c.b16 %v831, %v827
    %v1056 = vpack.c.b16 %v832, %v828
    %v1057 = vpack.c.b16 %v833, %v829
    %v1058 = vpack.c.b16 %v834, %v830
    %v1059 = vpack.c.b16 %v839, %v835
    %v1060 = vpack.c.b16 %v840, %v836
    %v1061 = vpack.c.b16 %v841, %v837
    %v1062 = vpack.c.b16 %v842, %v838
    %v1063 = vpack.c.b16 %v847, %v843
    %v1064 = vpack.c.b16 %v848, %v844
    %v1065 = vpack.c.b16 %v849, %v845
    %v1066 = vpack.c.b16 %v850, %v846
    %v1067 = vpack.c.b16 %v855, %v851
    %v1068 = vpack.c.b16 %v856, %v852
    %v1069 = vpack.c.b16 %v857, %v853
    %v1070 = vpack.c.b16 %v858, %v854
    %v1071 = vpack.c.b16 %v863, %v859
    %v1072 = vpack.c.b16 %v864, %v860
    %v1073 = vpack.c.b16 %v865, %v861
    %v1074 = vpack.c.b16 %v866, %v862
    %v1075 = vpack.c.b16 %v871, %v867
    %v1076 = vpack.c.b16 %v872, %v868
    %v1077 = vpack.c.b16 %v873, %v869
    %v1078 = vpack.c.b16 %v874, %v870
    %v1079 = vpack.c.b16 %v879, %v875
    %v1080 = vpack.c.b16 %v880, %v876
    %v1081 = vpack.c.b16 %v881, %v877
    %v1082 = vpack.c.b16 %v882, %v878
    %v1083 = vpack.c.b16 %v887, %v883
    %v1084 = vpack.c.b16 %v888, %v884
    %v1085 = vpack.c.b16 %v889, %v885
    %v1086 = vpack.c.b16 %v890, %v886
    %vm1283 = vcmask 130048
    %v1285 = vsel %vm1283, %v296, 0
    %1287 = vmatprep.subr.bf16.mxu0 %v892
    %1288 = vmatpush1.bf16.msra.mxu0 %v891
    %1289 = vmatprep.subr.bf16.mxu0 %v896
    %1290 = vmatpush1.bf16.msra.mxu0 %v895
    %1291 = vmatprep.subr.bf16.mxu0 %v900
    %1292 = vmatpush1.bf16.msra.mxu0 %v899
    %1293 = vmatprep.subr.bf16.mxu0 %v904
    %1294 = vmatpush1.bf16.msra.mxu0 %v903
    %1295 = vmatprep.subr.bf16.mxu0 %v908
    %1296 = vmatpush1.bf16.msra.mxu0 %v907
    %1297 = vmatprep.subr.bf16.mxu0 %v912
    %1298 = vmatpush1.bf16.msra.mxu0 %v911
    %1299 = vmatprep.subr.bf16.mxu0 %v916
    %1300 = vmatpush1.bf16.msra.mxu0 %v915
    %1301 = vmatprep.subr.bf16.mxu0 %v920
    %1302 = vmatpush1.bf16.msra.mxu0 %v919
    %1303 = vmatprep.subr.bf16.mxu0 %v924
    %1304 = vmatpush1.bf16.msra.mxu0 %v923
    %1305 = vmatprep.subr.bf16.mxu0 %v928
    %1306 = vmatpush1.bf16.msra.mxu0 %v927
    %1307 = vmatprep.subr.bf16.mxu0 %v932
    %1308 = vmatpush1.bf16.msra.mxu0 %v931
    %1309 = vmatprep.subr.bf16.mxu0 %v936
    %1310 = vmatpush1.bf16.msra.mxu0 %v935
    %1311 = vmatprep.subr.bf16.mxu0 %v940
    %1312 = vmatpush1.bf16.msra.mxu0 %v939
    %1313 = vmatprep.subr.bf16.mxu0 %v944
    %1314 = vmatpush1.bf16.msra.mxu0 %v943
    %1315 = vmatprep.subr.bf16.mxu0 %v948
    %1316 = vmatpush1.bf16.msra.mxu0 %v947
    %1317 = vmatprep.subr.bf16.mxu0 %v952
    %1318 = vmatpush1.bf16.msra.mxu0 %v951
    %1319 = vmatprep.mubr.bf16.mxu0 %v291
    %1320 = vmatmul.mubr.bf16.gmra.mrb[0].mxu0 %v290
    %v1321 = vpop.f32.mrb[0].mxu0
    %v1322 = vadd.f32 %v262, %v1321
    %v1323 = vpop.f32.mrb[0].mxu0
    %v1324 = vadd.f32 %v266, %v1323
    %v1325 = vpop.f32.mrb[0].mxu0
    %v1326 = vpop.f32.mrb[0].mxu0
    %1327 = vdwg.mxu0
    %1328 = vmatprep.subr.bf16.mxu0 %v956
    %1329 = vmatpush1.bf16.msra.mxu0 %v955
    %1330 = vmatprep.subr.bf16.mxu0 %v960
    %1331 = vmatpush1.bf16.msra.mxu0 %v959
    %1332 = vmatprep.subr.bf16.mxu0 %v964
    %1333 = vmatpush1.bf16.msra.mxu0 %v963
    %1334 = vmatprep.subr.bf16.mxu0 %v968
    %1335 = vmatpush1.bf16.msra.mxu0 %v967
    %1336 = vmatprep.subr.bf16.mxu0 %v972
    %1337 = vmatpush1.bf16.msra.mxu0 %v971
    %1338 = vmatprep.subr.bf16.mxu0 %v976
    %1339 = vmatpush1.bf16.msra.mxu0 %v975
    %1340 = vmatprep.subr.bf16.mxu0 %v980
    %1341 = vmatpush1.bf16.msra.mxu0 %v979
    %1342 = vmatprep.subr.bf16.mxu0 %v984
    %1343 = vmatpush1.bf16.msra.mxu0 %v983
    %1344 = vmatprep.subr.bf16.mxu0 %v988
    %1345 = vmatpush1.bf16.msra.mxu0 %v987
    %1346 = vmatprep.subr.bf16.mxu0 %v992
    %1347 = vmatpush1.bf16.msra.mxu0 %v991
    %1348 = vmatprep.subr.bf16.mxu0 %v996
    %1349 = vmatpush1.bf16.msra.mxu0 %v995
    %1350 = vmatprep.subr.bf16.mxu0 %v1000
    %1351 = vmatpush1.bf16.msra.mxu0 %v999
    %1352 = vmatprep.subr.bf16.mxu0 %v1004
    %1353 = vmatpush1.bf16.msra.mxu0 %v1003
    %1354 = vmatprep.subr.bf16.mxu0 %v1008
    %1355 = vmatpush1.bf16.msra.mxu0 %v1007
    %1356 = vmatprep.subr.bf16.mxu0 %v1012
    %1357 = vmatpush1.bf16.msra.mxu0 %v1011
    %1358 = vmatprep.subr.bf16.mxu0 %v1016
    %1359 = vmatpush1.bf16.msra.mxu0 %v1015
    %1360 = vmatprep.mubr.bf16.mxu0 %v293
    %1361 = vmatmul.mubr.bf16.gmra.mrb[0].mxu0 %v292
    %v1362 = vpop.f32.mrb[0].mxu0
    %v1363 = vadd.f32 %v1322, %v1362
    %v1364 = vpop.f32.mrb[0].mxu0
    %v1365 = vadd.f32 %v1324, %v1364
    %v1366 = vpop.f32.mrb[0].mxu0
    %v1367 = vpop.f32.mrb[0].mxu0
    %1368 = vdwg.mxu0
    %1369 = vmatprep.subr.bf16.mxu0 %v1020
    %1370 = vmatpush1.bf16.msra.mxu0 %v1019
    %1371 = vmatprep.subr.bf16.mxu0 %v1024
    %1372 = vmatpush1.bf16.msra.mxu0 %v1023
    %1373 = vmatprep.subr.bf16.mxu0 %v1028
    %1374 = vmatpush1.bf16.msra.mxu0 %v1027
    %1375 = vmatprep.subr.bf16.mxu0 %v1032
    %1376 = vmatpush1.bf16.msra.mxu0 %v1031
    %1377 = vmatprep.subr.bf16.mxu0 %v1036
    %1378 = vmatpush1.bf16.msra.mxu0 %v1035
    %1379 = vmatprep.subr.bf16.mxu0 %v1040
    %1380 = vmatpush1.bf16.msra.mxu0 %v1039
    %1381 = vmatprep.subr.bf16.mxu0 %v1044
    %1382 = vmatpush1.bf16.msra.mxu0 %v1043
    %1383 = vmatprep.subr.bf16.mxu0 %v1048
    %1384 = vmatpush1.bf16.msra.mxu0 %v1047
    %1385 = vmatprep.subr.bf16.mxu0 %v1052
    %1386 = vmatpush1.bf16.msra.mxu0 %v1051
    %1387 = vmatprep.subr.bf16.mxu0 %v1056
    %1388 = vmatpush1.bf16.msra.mxu0 %v1055
    %1389 = vmatprep.subr.bf16.mxu0 %v1060
    %1390 = vmatpush1.bf16.msra.mxu0 %v1059
    %1391 = vmatprep.subr.bf16.mxu0 %v1064
    %1392 = vmatpush1.bf16.msra.mxu0 %v1063
    %1393 = vmatprep.subr.bf16.mxu0 %v1068
    %1394 = vmatpush1.bf16.msra.mxu0 %v1067
    %1395 = vmatprep.subr.bf16.mxu0 %v1072
    %1396 = vmatpush1.bf16.msra.mxu0 %v1071
    %1397 = vmatprep.subr.bf16.mxu0 %v1076
    %1398 = vmatpush1.bf16.msra.mxu0 %v1075
    %1399 = vmatprep.subr.bf16.mxu0 %v1080
    %1400 = vmatpush1.bf16.msra.mxu0 %v1079
    %1401 = vmatprep.mubr.bf16.mxu0 %v295
    %1402 = vmatmul.mubr.bf16.gmra.mrb[0].mxu0 %v294
    %v1403 = vpop.f32.mrb[0].mxu0
    %v1404 = vadd.f32 %v1363, %v1403
    %v1405 = vpop.f32.mrb[0].mxu0
    %v1406 = vadd.f32 %v1365, %v1405
    %v1407 = vpop.f32.mrb[0].mxu0
    %v1408 = vpop.f32.mrb[0].mxu0
    %1409 = vdwg.mxu0
    %1410 = vmatprep.subr.bf16.mxu0 %v1084
    %1411 = vmatpush1.bf16.msra.mxu0 %v1083
    %1412 = vmatprep.subr.bf16.mxu0 0
    %1413 = vmatpush1.bf16.msra.mxu0 0
    %1414 = vmatprep.subr.bf16.mxu0 0
    %1415 = vmatpush1.bf16.msra.mxu0 0
    %1416 = vmatprep.subr.bf16.mxu0 0
    %1417 = vmatpush1.bf16.msra.mxu0 0
    %1418 = vmatprep.subr.bf16.mxu0 0
    %1419 = vmatpush1.bf16.msra.mxu0 0
    %1420 = vmatprep.subr.bf16.mxu0 0
    %1421 = vmatpush1.bf16.msra.mxu0 0
    %1422 = vmatprep.subr.bf16.mxu0 0
    %1423 = vmatpush1.bf16.msra.mxu0 0
    %1424 = vmatprep.subr.bf16.mxu0 0
    %1425 = vmatpush1.bf16.msra.mxu0 0
    %1426 = vmatprep.subr.bf16.mxu0 0
    %1427 = vmatpush1.bf16.msra.mxu0 0
    %1428 = vmatprep.subr.bf16.mxu0 0
    %1429 = vmatpush1.bf16.msra.mxu0 0
    %1430 = vmatprep.subr.bf16.mxu0 0
    %1431 = vmatpush1.bf16.msra.mxu0 0
    %1432 = vmatprep.subr.bf16.mxu0 0
    %1433 = vmatpush1.bf16.msra.mxu0 0
    %1434 = vmatprep.subr.bf16.mxu0 0
    %1435 = vmatpush1.bf16.msra.mxu0 0
    %1436 = vmatprep.subr.bf16.mxu0 0
    %1437 = vmatpush1.bf16.msra.mxu0 0
    %1438 = vmatprep.subr.bf16.mxu0 0
    %1439 = vmatpush1.bf16.msra.mxu0 0
    %1440 = vmatprep.subr.bf16.mxu0 0
    %1441 = vmatpush1.bf16.msra.mxu0 0
    %1442 = vmatprep.mubr.bf16.mxu0 0
    %1443 = vmatmul.mubr.bf16.gmra.mrb[0].mxu0 %v1285
    %v1444 = vpop.f32.mrb[0].mxu0
    %v1445 = vadd.f32 %v1404, %v1444
    %v1446 = vpop.f32.mrb[0].mxu0
    %v1447 = vadd.f32 %v1406, %v1446
    %v1448 = vpop.f32.mrb[0].mxu0
    %v1449 = vpop.f32.mrb[0].mxu0
    %1450 = vdwg.mxu0
    %1451 = vmatprep.subr.bf16.mxu0 %v894
    %1452 = vmatpush1.bf16.msra.mxu0 %v893
    %1453 = vmatprep.subr.bf16.mxu0 %v898
    %1454 = vmatpush1.bf16.msra.mxu0 %v897
    %1455 = vmatprep.subr.bf16.mxu0 %v902
    %1456 = vmatpush1.bf16.msra.mxu0 %v901
    %1457 = vmatprep.subr.bf16.mxu0 %v906
    %1458 = vmatpush1.bf16.msra.mxu0 %v905
    %1459 = vmatprep.subr.bf16.mxu0 %v910
    %1460 = vmatpush1.bf16.msra.mxu0 %v909
    %1461 = vmatprep.subr.bf16.mxu0 %v914
    %1462 = vmatpush1.bf16.msra.mxu0 %v913
    %1463 = vmatprep.subr.bf16.mxu0 %v918
    %1464 = vmatpush1.bf16.msra.mxu0 %v917
    %1465 = vmatprep.subr.bf16.mxu0 %v922
    %1466 = vmatpush1.bf16.msra.mxu0 %v921
    %1467 = vmatprep.subr.bf16.mxu0 %v926
    %1468 = vmatpush1.bf16.msra.mxu0 %v925
    %1469 = vmatprep.subr.bf16.mxu0 %v930
    %1470 = vmatpush1.bf16.msra.mxu0 %v929
    %1471 = vmatprep.subr.bf16.mxu0 %v934
    %1472 = vmatpush1.bf16.msra.mxu0 %v933
    %1473 = vmatprep.subr.bf16.mxu0 %v938
    %1474 = vmatpush1.bf16.msra.mxu0 %v937
    %1475 = vmatprep.subr.bf16.mxu0 %v942
    %1476 = vmatpush1.bf16.msra.mxu0 %v941
    %1477 = vmatprep.subr.bf16.mxu0 %v946
    %1478 = vmatpush1.bf16.msra.mxu0 %v945
    %1479 = vmatprep.subr.bf16.mxu0 %v950
    %1480 = vmatpush1.bf16.msra.mxu0 %v949
    %1481 = vmatprep.subr.bf16.mxu0 %v954
    %1482 = vmatpush1.bf16.msra.mxu0 %v953
    %1483 = vmatprep.mubr.bf16.mxu0 %v291
    %1484 = vmatmul.mubr.bf16.gmra.mrb[0].mxu0 %v290
    %v1485 = vpop.f32.mrb[0].mxu0
    %v1486 = vadd.f32 %v270, %v1485
    %v1487 = vpop.f32.mrb[0].mxu0
    %v1488 = vadd.f32 %v274, %v1487
    %v1489 = vpop.f32.mrb[0].mxu0
    %v1490 = vpop.f32.mrb[0].mxu0
    %1491 = vdwg.mxu0
    %1492 = vmatprep.subr.bf16.mxu0 %v958
    %1493 = vmatpush1.bf16.msra.mxu0 %v957
    %1494 = vmatprep.subr.bf16.mxu0 %v962
    %1495 = vmatpush1.bf16.msra.mxu0 %v961
    %1496 = vmatprep.subr.bf16.mxu0 %v966
    %1497 = vmatpush1.bf16.msra.mxu0 %v965
    %1498 = vmatprep.subr.bf16.mxu0 %v970
    %1499 = vmatpush1.bf16.msra.mxu0 %v969
    %1500 = vmatprep.subr.bf16.mxu0 %v974
    %1501 = vmatpush1.bf16.msra.mxu0 %v973
    %1502 = vmatprep.subr.bf16.mxu0 %v978
    %1503 = vmatpush1.bf16.msra.mxu0 %v977
    %1504 = vmatprep.subr.bf16.mxu0 %v982
    %1505 = vmatpush1.bf16.msra.mxu0 %v981
    %1506 = vmatprep.subr.bf16.mxu0 %v986
    %1507 = vmatpush1.bf16.msra.mxu0 %v985
    %1508 = vmatprep.subr.bf16.mxu0 %v990
    %1509 = vmatpush1.bf16.msra.mxu0 %v989
    %1510 = vmatprep.subr.bf16.mxu0 %v994
    %1511 = vmatpush1.bf16.msra.mxu0 %v993
    %1512 = vmatprep.subr.bf16.mxu0 %v998
    %1513 = vmatpush1.bf16.msra.mxu0 %v997
    %1514 = vmatprep.subr.bf16.mxu0 %v1002
    %1515 = vmatpush1.bf16.msra.mxu0 %v1001
    %1516 = vmatprep.subr.bf16.mxu0 %v1006
    %1517 = vmatpush1.bf16.msra.mxu0 %v1005
    %1518 = vmatprep.subr.bf16.mxu0 %v1010
    %1519 = vmatpush1.bf16.msra.mxu0 %v1009
    %1520 = vmatprep.subr.bf16.mxu0 %v1014
    %1521 = vmatpush1.bf16.msra.mxu0 %v1013
    %1522 = vmatprep.subr.bf16.mxu0 %v1018
    %1523 = vmatpush1.bf16.msra.mxu0 %v1017
    %1524 = vmatprep.mubr.bf16.mxu0 %v293
    %1525 = vmatmul.mubr.bf16.gmra.mrb[0].mxu0 %v292
    %v1526 = vpop.f32.mrb[0].mxu0
    %v1527 = vadd.f32 %v1486, %v1526
    %v1528 = vpop.f32.mrb[0].mxu0
    %v1529 = vadd.f32 %v1488, %v1528
    %v1530 = vpop.f32.mrb[0].mxu0
    %v1531 = vpop.f32.mrb[0].mxu0
    %1532 = vdwg.mxu0
    %1533 = vmatprep.subr.bf16.mxu0 %v1022
    %1534 = vmatpush1.bf16.msra.mxu0 %v1021
    %1535 = vmatprep.subr.bf16.mxu0 %v1026
    %1536 = vmatpush1.bf16.msra.mxu0 %v1025
    %1537 = vmatprep.subr.bf16.mxu0 %v1030
    %1538 = vmatpush1.bf16.msra.mxu0 %v1029
    %1539 = vmatprep.subr.bf16.mxu0 %v1034
    %1540 = vmatpush1.bf16.msra.mxu0 %v1033
    %1541 = vmatprep.subr.bf16.mxu0 %v1038
    %1542 = vmatpush1.bf16.msra.mxu0 %v1037
    %1543 = vmatprep.subr.bf16.mxu0 %v1042
    %1544 = vmatpush1.bf16.msra.mxu0 %v1041
    %1545 = vmatprep.subr.bf16.mxu0 %v1046
    %1546 = vmatpush1.bf16.msra.mxu0 %v1045
    %1547 = vmatprep.subr.bf16.mxu0 %v1050
    %1548 = vmatpush1.bf16.msra.mxu0 %v1049
    %1549 = vmatprep.subr.bf16.mxu0 %v1054
    %1550 = vmatpush1.bf16.msra.mxu0 %v1053
    %1551 = vmatprep.subr.bf16.mxu0 %v1058
    %1552 = vmatpush1.bf16.msra.mxu0 %v1057
    %1553 = vmatprep.subr.bf16.mxu0 %v1062
    %1554 = vmatpush1.bf16.msra.mxu0 %v1061
    %1555 = vmatprep.subr.bf16.mxu0 %v1066
    %1556 = vmatpush1.bf16.msra.mxu0 %v1065
    %1557 = vmatprep.subr.bf16.mxu0 %v1070
    %1558 = vmatpush1.bf16.msra.mxu0 %v1069
    %1559 = vmatprep.subr.bf16.mxu0 %v1074
    %1560 = vmatpush1.bf16.msra.mxu0 %v1073
    %1561 = vmatprep.subr.bf16.mxu0 %v1078
    %1562 = vmatpush1.bf16.msra.mxu0 %v1077
    %1563 = vmatprep.subr.bf16.mxu0 %v1082
    %1564 = vmatpush1.bf16.msra.mxu0 %v1081
    %1565 = vmatprep.mubr.bf16.mxu0 %v295
    %1566 = vmatmul.mubr.bf16.gmra.mrb[0].mxu0 %v294
    %v1567 = vpop.f32.mrb[0].mxu0
    %v1568 = vadd.f32 %v1527, %v1567
    %v1569 = vpop.f32.mrb[0].mxu0
    %v1570 = vadd.f32 %v1529, %v1569
    %v1571 = vpop.f32.mrb[0].mxu0
    %v1572 = vpop.f32.mrb[0].mxu0
    %1573 = vdwg.mxu0
    %1574 = vmatprep.subr.bf16.mxu0 %v1086
    %1575 = vmatpush1.bf16.msra.mxu0 %v1085
    %1576 = vmatprep.subr.bf16.mxu0 0
    %1577 = vmatpush1.bf16.msra.mxu0 0
    %1578 = vmatprep.subr.bf16.mxu0 0
    %1579 = vmatpush1.bf16.msra.mxu0 0
    %1580 = vmatprep.subr.bf16.mxu0 0
    %1581 = vmatpush1.bf16.msra.mxu0 0
    %1582 = vmatprep.subr.bf16.mxu0 0
    %1583 = vmatpush1.bf16.msra.mxu0 0
    %1584 = vmatprep.subr.bf16.mxu0 0
    %1585 = vmatpush1.bf16.msra.mxu0 0
    %1586 = vmatprep.subr.bf16.mxu0 0
    %1587 = vmatpush1.bf16.msra.mxu0 0
    %1588 = vmatprep.subr.bf16.mxu0 0
    %1589 = vmatpush1.bf16.msra.mxu0 0
    %1590 = vmatprep.subr.bf16.mxu0 0
    %1591 = vmatpush1.bf16.msra.mxu0 0
    %1592 = vmatprep.subr.bf16.mxu0 0
    %1593 = vmatpush1.bf16.msra.mxu0 0
    %1594 = vmatprep.subr.bf16.mxu0 0
    %1595 = vmatpush1.bf16.msra.mxu0 0
    %1596 = vmatprep.subr.bf16.mxu0 0
    %1597 = vmatpush1.bf16.msra.mxu0 0
    %1598 = vmatprep.subr.bf16.mxu0 0
    %1599 = vmatpush1.bf16.msra.mxu0 0
    %1600 = vmatprep.subr.bf16.mxu0 0
    %1601 = vmatpush1.bf16.msra.mxu0 0
    %1602 = vmatprep.subr.bf16.mxu0 0
    %1603 = vmatpush1.bf16.msra.mxu0 0
    %1604 = vmatprep.subr.bf16.mxu0 0
    %1605 = vmatpush1.bf16.msra.mxu0 0
    %1606 = vmatprep.mubr.bf16.mxu0 0
    %1607 = vmatmul.mubr.bf16.gmra.mrb[0].mxu0 %v1285
    %v1608 = vpop.f32.mrb[0].mxu0
    %v1609 = vadd.f32 %v1568, %v1608
    %v1610 = vpop.f32.mrb[0].mxu0
    %v1611 = vadd.f32 %v1570, %v1610
    %v1612 = vpop.f32.mrb[0].mxu0
    %v1613 = vpop.f32.mrb[0].mxu0
    %1614 = vdwg.mxu0
    %vm1615 = vcmp.gt.f32.partialorder %v1445, 0.0
    %vm1616 = vcmp.gt.f32.partialorder %v1447, 0.0
    %vm1617 = vcmp.gt.f32.partialorder %v1609, 0.0
    %vm1618 = vcmp.gt.f32.partialorder %v1611, 0.0
    %v1619 = vmul.f32 %v1445, 0.01
    %v1620 = vmul.f32 %v1447, 0.01
    %v1621 = vmul.f32 %v1609, 0.01
    %v1622 = vmul.f32 %v1611, 0.01
    %v1623 = vsel %vm1615, %v1445, %v1619
    %v1624 = vsel %vm1616, %v1447, %v1620
    %v1625 = vsel %vm1617, %v1609, %v1621
    %v1626 = vsel %vm1618, %v1611, %v1622
    %v1627 = vpack.c.bf16 %v1623, %v1623
    %v1628 = vpack.c.bf16 %v1624, %v1624
    %v1629 = vpack.c.bf16 %v1625, %v1625
    %v1630 = vpack.c.bf16 %v1626, %v1626
    %v1631 = vld [vmem:[#allocation5] sm:$0xff]
    %v1632 = vld [vmem:[#allocation5 + $0x8] sm:$0xff]
    %v1633 = vld [vmem:[#allocation5 + $0x10] sm:$0xff]
    %v1634 = vld [vmem:[#allocation5 + $0x18] sm:$0xff]
    %v1635 = vld [vmem:[#allocation5 + $0x20] sm:$0xff]
    %v1636 = vld [vmem:[#allocation5 + $0x28] sm:$0xff]
    %v1637 = vld [vmem:[#allocation5 + $0x30] sm:$0xff]
    %v1638 = vld [vmem:[#allocation5 + $0x38] sm:$0xff]
    %v1639 = vld [vmem:[#allocation5 + $0x40] sm:$0xff]
    %v1640 = vld [vmem:[#allocation5 + $0x48] sm:$0xff]
    %v1641 = vld [vmem:[#allocation5 + $0x50] sm:$0xff]
    %v1642 = vld [vmem:[#allocation5 + $0x58] sm:$0xff]
    %v1643 = vld [vmem:[#allocation5 + $0x60] sm:$0xff]
    %v1644 = vld [vmem:[#allocation5 + $0x68] sm:$0xff]
    %v1645 = vld [vmem:[#allocation5 + $0x70] sm:$0xff]
    %v1646 = vld [vmem:[#allocation5 + $0x78] sm:$0xff]
    %v1647 = vld [vmem:[#allocation5 + $0x80] sm:$0xff]
    %v1648 = vld [vmem:[#allocation5 + $0x88] sm:$0xff]
    %v1649 = vld [vmem:[#allocation5 + $0x90] sm:$0xff]
    %v1650 = vld [vmem:[#allocation5 + $0x98] sm:$0xff]
    %v1651 = vld [vmem:[#allocation5 + $0xa0] sm:$0xff]
    %v1652 = vld [vmem:[#allocation5 + $0xa8] sm:$0xff]
    %v1653 = vld [vmem:[#allocation5 + $0xb0] sm:$0xff]
    %v1654 = vld [vmem:[#allocation5 + $0xb8] sm:$0xff]
    %v1655 = vld [vmem:[#allocation5 + $0xc0] sm:$0xff]
    %v1656 = vld [vmem:[#allocation5 + $0xc8] sm:$0xff]
    %v1657 = vld [vmem:[#allocation5 + $0xd0] sm:$0xff]
    %v1658 = vld [vmem:[#allocation5 + $0xd8] sm:$0xff]
    %v1659 = vld [vmem:[#allocation5 + $0xe0] sm:$0xff]
    %v1660 = vld [vmem:[#allocation5 + $0xe8] sm:$0xff]
    %v1661 = vld [vmem:[#allocation5 + $0xf0] sm:$0xff]
    %v1662 = vld [vmem:[#allocation5 + $0xf8] sm:$0xff]
    %v1663 = vld [vmem:[#allocation5 + $0x100] sm:$0xff]
    %v1664 = vld [vmem:[#allocation5 + $0x108] sm:$0xff]
    %v1665 = vld [vmem:[#allocation5 + $0x110] sm:$0xff]
    %v1666 = vld [vmem:[#allocation5 + $0x118] sm:$0xff]
    %v1667 = vld [vmem:[#allocation5 + $0x120] sm:$0xff]
    %v1668 = vld [vmem:[#allocation5 + $0x128] sm:$0xff]
    %v1669 = vld [vmem:[#allocation5 + $0x130] sm:$0xff]
    %v1670 = vld [vmem:[#allocation5 + $0x138] sm:$0xff]
    %v1671 = vld [vmem:[#allocation5 + $0x140] sm:$0xff]
    %v1672 = vld [vmem:[#allocation5 + $0x148] sm:$0xff]
    %v1673 = vld [vmem:[#allocation5 + $0x150] sm:$0xff]
    %v1674 = vld [vmem:[#allocation5 + $0x158] sm:$0xff]
    %v1675 = vld [vmem:[#allocation5 + $0x160] sm:$0xff]
    %v1676 = vld [vmem:[#allocation5 + $0x168] sm:$0xff]
    %v1677 = vld [vmem:[#allocation5 + $0x170] sm:$0xff]
    %v1678 = vld [vmem:[#allocation5 + $0x178] sm:$0xff]
    %v1679 = vld [vmem:[#allocation5 + $0x180] sm:$0xff]
    %v1680 = vld [vmem:[#allocation5 + $0x188] sm:$0xff]
    %v1681 = vld [vmem:[#allocation5 + $0x190] sm:$0xff]
    %v1682 = vld [vmem:[#allocation5 + $0x198] sm:$0xff]
    %v1683 = vld [vmem:[#allocation5 + $0x1a0] sm:$0xff]
    %v1684 = vld [vmem:[#allocation5 + $0x1a8] sm:$0xff]
    %v1685 = vld [vmem:[#allocation5 + $0x1b0] sm:$0xff]
    %v1686 = vld [vmem:[#allocation5 + $0x1b8] sm:$0xff]
    %v1687 = vld [vmem:[#allocation5 + $0x1c0] sm:$0xff]
    %v1688 = vld [vmem:[#allocation5 + $0x1c8] sm:$0xff]
    %v1689 = vld [vmem:[#allocation5 + $0x1d0] sm:$0xff]
    %v1690 = vld [vmem:[#allocation5 + $0x1d8] sm:$0xff]
    %v1691 = vld [vmem:[#allocation5 + $0x1e0] sm:$0xff]
    %v1692 = vld [vmem:[#allocation5 + $0x1e8] sm:$0xff]
    %v1693 = vld [vmem:[#allocation5 + $0x1f0] sm:$0xff]
    %v1694 = vld [vmem:[#allocation5 + $0x1f8] sm:$0xff]
    %v1695 = vld [vmem:[%s4] sm:$0x3]
    %v1697 = vlaneseq
    %v1698 = vshrl.u32 %v1697, 7
    %v1699 = vsub.s32 0, %v1698
    %v1700 = vrot.slane %v1695, %v1699
    %v1701 = vlaneseq
    %v1702 = vshrl.u32 %v1701, 7
    %v1703 = vsub.s32 1, %v1702
    %v1704 = vrot.slane %v1695, %v1703
    %v1771 = vunpack.c.l.b16 %v1631
    %v1772 = vunpack.c.h.b16 %v1631
    %v1773 = vunpack.c.l.b16 %v1632
    %v1774 = vunpack.c.h.b16 %v1632
    %v1775 = vunpack.c.l.b16 %v1633
    %v1776 = vunpack.c.h.b16 %v1633
    %v1777 = vunpack.c.l.b16 %v1634
    %v1778 = vunpack.c.h.b16 %v1634
    %v1779 = vunpack.c.l.b16 %v1635
    %v1780 = vunpack.c.h.b16 %v1635
    %v1781 = vunpack.c.l.b16 %v1636
    %v1782 = vunpack.c.h.b16 %v1636
    %v1783 = vunpack.c.l.b16 %v1637
    %v1784 = vunpack.c.h.b16 %v1637
    %v1785 = vunpack.c.l.b16 %v1638
    %v1786 = vunpack.c.h.b16 %v1638
    %v1787 = vunpack.c.l.b16 %v1639
    %v1788 = vunpack.c.h.b16 %v1639
    %v1789 = vunpack.c.l.b16 %v1640
    %v1790 = vunpack.c.h.b16 %v1640
    %v1791 = vunpack.c.l.b16 %v1641
    %v1792 = vunpack.c.h.b16 %v1641
    %v1793 = vunpack.c.l.b16 %v1642
    %v1794 = vunpack.c.h.b16 %v1642
    %v1795 = vunpack.c.l.b16 %v1643
    %v1796 = vunpack.c.h.b16 %v1643
    %v1797 = vunpack.c.l.b16 %v1644
    %v1798 = vunpack.c.h.b16 %v1644
    %v1799 = vunpack.c.l.b16 %v1645
    %v1800 = vunpack.c.h.b16 %v1645
    %v1801 = vunpack.c.l.b16 %v1646
    %v1802 = vunpack.c.h.b16 %v1646
    %v1803 = vunpack.c.l.b16 %v1647
    %v1804 = vunpack.c.h.b16 %v1647
    %v1805 = vunpack.c.l.b16 %v1648
    %v1806 = vunpack.c.h.b16 %v1648
    %v1807 = vunpack.c.l.b16 %v1649
    %v1808 = vunpack.c.h.b16 %v1649
    %v1809 = vunpack.c.l.b16 %v1650
    %v1810 = vunpack.c.h.b16 %v1650
    %v1811 = vunpack.c.l.b16 %v1651
    %v1812 = vunpack.c.h.b16 %v1651
    %v1813 = vunpack.c.l.b16 %v1652
    %v1814 = vunpack.c.h.b16 %v1652
    %v1815 = vunpack.c.l.b16 %v1653
    %v1816 = vunpack.c.h.b16 %v1653
    %v1817 = vunpack.c.l.b16 %v1654
    %v1818 = vunpack.c.h.b16 %v1654
    %v1819 = vunpack.c.l.b16 %v1655
    %v1820 = vunpack.c.h.b16 %v1655
    %v1821 = vunpack.c.l.b16 %v1656
    %v1822 = vunpack.c.h.b16 %v1656
    %v1823 = vunpack.c.l.b16 %v1657
    %v1824 = vunpack.c.h.b16 %v1657
    %v1825 = vunpack.c.l.b16 %v1658
    %v1826 = vunpack.c.h.b16 %v1658
    %v1827 = vunpack.c.l.b16 %v1659
    %v1828 = vunpack.c.h.b16 %v1659
    %v1829 = vunpack.c.l.b16 %v1660
    %v1830 = vunpack.c.h.b16 %v1660
    %v1831 = vunpack.c.l.b16 %v1661
    %v1832 = vunpack.c.h.b16 %v1661
    %v1833 = vunpack.c.l.b16 %v1662
    %v1834 = vunpack.c.h.b16 %v1662
    %v1835 = vunpack.c.l.b16 %v1663
    %v1836 = vunpack.c.h.b16 %v1663
    %v1837 = vunpack.c.l.b16 %v1664
    %v1838 = vunpack.c.h.b16 %v1664
    %v1839 = vunpack.c.l.b16 %v1665
    %v1840 = vunpack.c.h.b16 %v1665
    %v1841 = vunpack.c.l.b16 %v1666
    %v1842 = vunpack.c.h.b16 %v1666
    %v1843 = vunpack.c.l.b16 %v1667
    %v1844 = vunpack.c.h.b16 %v1667
    %v1845 = vunpack.c.l.b16 %v1668
    %v1846 = vunpack.c.h.b16 %v1668
    %v1847 = vunpack.c.l.b16 %v1669
    %v1848 = vunpack.c.h.b16 %v1669
    %v1849 = vunpack.c.l.b16 %v1670
    %v1850 = vunpack.c.h.b16 %v1670
    %v1851 = vunpack.c.l.b16 %v1671
    %v1852 = vunpack.c.h.b16 %v1671
    %v1853 = vunpack.c.l.b16 %v1672
    %v1854 = vunpack.c.h.b16 %v1672
    %v1855 = vunpack.c.l.b16 %v1673
    %v1856 = vunpack.c.h.b16 %v1673
    %v1857 = vunpack.c.l.b16 %v1674
    %v1858 = vunpack.c.h.b16 %v1674
    %v1859 = vunpack.c.l.b16 %v1675
    %v1860 = vunpack.c.h.b16 %v1675
    %v1861 = vunpack.c.l.b16 %v1676
    %v1862 = vunpack.c.h.b16 %v1676
    %v1863 = vunpack.c.l.b16 %v1677
    %v1864 = vunpack.c.h.b16 %v1677
    %v1865 = vunpack.c.l.b16 %v1678
    %v1866 = vunpack.c.h.b16 %v1678
    %v1867 = vunpack.c.l.b16 %v1679
    %v1868 = vunpack.c.h.b16 %v1679
    %v1869 = vunpack.c.l.b16 %v1680
    %v1870 = vunpack.c.h.b16 %v1680
    %v1871 = vunpack.c.l.b16 %v1681
    %v1872 = vunpack.c.h.b16 %v1681
    %v1873 = vunpack.c.l.b16 %v1682
    %v1874 = vunpack.c.h.b16 %v1682
    %v1875 = vunpack.c.l.b16 %v1683
    %v1876 = vunpack.c.h.b16 %v1683
    %v1877 = vunpack.c.l.b16 %v1684
    %v1878 = vunpack.c.h.b16 %v1684
    %v1879 = vunpack.c.l.b16 %v1685
    %v1880 = vunpack.c.h.b16 %v1685
    %v1881 = vunpack.c.l.b16 %v1686
    %v1882 = vunpack.c.h.b16 %v1686
    %v1883 = vunpack.c.l.b16 %v1687
    %v1884 = vunpack.c.h.b16 %v1687
    %v1885 = vunpack.c.l.b16 %v1688
    %v1886 = vunpack.c.h.b16 %v1688
    %v1887 = vunpack.c.l.b16 %v1689
    %v1888 = vunpack.c.h.b16 %v1689
    %v1889 = vunpack.c.l.b16 %v1690
    %v1890 = vunpack.c.h.b16 %v1690
    %v1891 = vunpack.c.l.b16 %v1691
    %v1892 = vunpack.c.h.b16 %v1691
    %v1893 = vunpack.c.l.b16 %v1692
    %v1894 = vunpack.c.h.b16 %v1692
    %v1895 = vunpack.c.l.b16 %v1693
    %v1896 = vunpack.c.h.b16 %v1693
    %v1897 = vunpack.c.l.b16 %v1694
    %v1898 = vunpack.c.h.b16 %v1694
    %v1899 = vpack.c.b16 %v1773, %v1771
    %v1900 = vpack.c.b16 %v1774, %v1772
    %v1901 = vpack.c.b16 %v1777, %v1775
    %v1902 = vpack.c.b16 %v1778, %v1776
    %v1903 = vpack.c.b16 %v1781, %v1779
    %v1904 = vpack.c.b16 %v1782, %v1780
    %v1905 = vpack.c.b16 %v1785, %v1783
    %v1906 = vpack.c.b16 %v1786, %v1784
    %v1907 = vpack.c.b16 %v1789, %v1787
    %v1908 = vpack.c.b16 %v1790, %v1788
    %v1909 = vpack.c.b16 %v1793, %v1791
    %v1910 = vpack.c.b16 %v1794, %v1792
    %v1911 = vpack.c.b16 %v1797, %v1795
    %v1912 = vpack.c.b16 %v1798, %v1796
    %v1913 = vpack.c.b16 %v1801, %v1799
    %v1914 = vpack.c.b16 %v1802, %v1800
    %v1915 = vpack.c.b16 %v1805, %v1803
    %v1916 = vpack.c.b16 %v1806, %v1804
    %v1917 = vpack.c.b16 %v1809, %v1807
    %v1918 = vpack.c.b16 %v1810, %v1808
    %v1919 = vpack.c.b16 %v1813, %v1811
    %v1920 = vpack.c.b16 %v1814, %v1812
    %v1921 = vpack.c.b16 %v1817, %v1815
    %v1922 = vpack.c.b16 %v1818, %v1816
    %v1923 = vpack.c.b16 %v1821, %v1819
    %v1924 = vpack.c.b16 %v1822, %v1820
    %v1925 = vpack.c.b16 %v1825, %v1823
    %v1926 = vpack.c.b16 %v1826, %v1824
    %v1927 = vpack.c.b16 %v1829, %v1827
    %v1928 = vpack.c.b16 %v1830, %v1828
    %v1929 = vpack.c.b16 %v1833, %v1831
    %v1930 = vpack.c.b16 %v1834, %v1832
    %v1931 = vpack.c.b16 %v1837, %v1835
    %v1932 = vpack.c.b16 %v1838, %v1836
    %v1933 = vpack.c.b16 %v1841, %v1839
    %v1934 = vpack.c.b16 %v1842, %v1840
    %v1935 = vpack.c.b16 %v1845, %v1843
    %v1936 = vpack.c.b16 %v1846, %v1844
    %v1937 = vpack.c.b16 %v1849, %v1847
    %v1938 = vpack.c.b16 %v1850, %v1848
    %v1939 = vpack.c.b16 %v1853, %v1851
    %v1940 = vpack.c.b16 %v1854, %v1852
    %v1941 = vpack.c.b16 %v1857, %v1855
    %v1942 = vpack.c.b16 %v1858, %v1856
    %v1943 = vpack.c.b16 %v1861, %v1859
    %v1944 = vpack.c.b16 %v1862, %v1860
    %v1945 = vpack.c.b16 %v1865, %v1863
    %v1946 = vpack.c.b16 %v1866, %v1864
    %v1947 = vpack.c.b16 %v1869, %v1867
    %v1948 = vpack.c.b16 %v1870, %v1868
    %v1949 = vpack.c.b16 %v1873, %v1871
    %v1950 = vpack.c.b16 %v1874, %v1872
    %v1951 = vpack.c.b16 %v1877, %v1875
    %v1952 = vpack.c.b16 %v1878, %v1876
    %v1953 = vpack.c.b16 %v1881, %v1879
    %v1954 = vpack.c.b16 %v1882, %v1880
    %v1955 = vpack.c.b16 %v1885, %v1883
    %v1956 = vpack.c.b16 %v1886, %v1884
    %v1957 = vpack.c.b16 %v1889, %v1887
    %v1958 = vpack.c.b16 %v1890, %v1888
    %v1959 = vpack.c.b16 %v1893, %v1891
    %v1960 = vpack.c.b16 %v1894, %v1892
    %v1961 = vpack.c.b16 %v1897, %v1895
    %v1962 = vpack.c.b16 %v1898, %v1896
    %2027 = vmatprep.subr.bf16.mxu0 %v1900
    %2028 = vmatpush1.bf16.msra.mxu0 %v1899
    %2029 = vmatprep.subr.bf16.mxu0 %v1902
    %2030 = vmatpush1.bf16.msra.mxu0 %v1901
    %2031 = vmatprep.subr.bf16.mxu0 %v1904
    %2032 = vmatpush1.bf16.msra.mxu0 %v1903
    %2033 = vmatprep.subr.bf16.mxu0 %v1906
    %2034 = vmatpush1.bf16.msra.mxu0 %v1905
    %2035 = vmatprep.subr.bf16.mxu0 %v1908
    %2036 = vmatpush1.bf16.msra.mxu0 %v1907
    %2037 = vmatprep.subr.bf16.mxu0 %v1910
    %2038 = vmatpush1.bf16.msra.mxu0 %v1909
    %2039 = vmatprep.subr.bf16.mxu0 %v1912
    %2040 = vmatpush1.bf16.msra.mxu0 %v1911
    %2041 = vmatprep.subr.bf16.mxu0 %v1914
    %2042 = vmatpush1.bf16.msra.mxu0 %v1913
    %2043 = vmatprep.subr.bf16.mxu0 %v1916
    %2044 = vmatpush1.bf16.msra.mxu0 %v1915
    %2045 = vmatprep.subr.bf16.mxu0 %v1918
    %2046 = vmatpush1.bf16.msra.mxu0 %v1917
    %2047 = vmatprep.subr.bf16.mxu0 %v1920
    %2048 = vmatpush1.bf16.msra.mxu0 %v1919
    %2049 = vmatprep.subr.bf16.mxu0 %v1922
    %2050 = vmatpush1.bf16.msra.mxu0 %v1921
    %2051 = vmatprep.subr.bf16.mxu0 %v1924
    %2052 = vmatpush1.bf16.msra.mxu0 %v1923
    %2053 = vmatprep.subr.bf16.mxu0 %v1926
    %2054 = vmatpush1.bf16.msra.mxu0 %v1925
    %2055 = vmatprep.subr.bf16.mxu0 %v1928
    %2056 = vmatpush1.bf16.msra.mxu0 %v1927
    %2057 = vmatprep.subr.bf16.mxu0 %v1930
    %2058 = vmatpush1.bf16.msra.mxu0 %v1929
    %2059 = vmatprep.mubr.bf16.mxu0 %v1628
    %2060 = vmatmul.mubr.bf16.gmra.mrb[0].mxu0 %v1627
    %v2061 = vpop.f32.mrb[0].mxu0
    %v2062 = vadd.f32 %v1700, %v2061
    %v2063 = vpop.f32.mrb[0].mxu0
    %v2064 = vadd.f32 %v1704, %v2063
    %v2065 = vpop.f32.mrb[0].mxu0
    %v2066 = vpop.f32.mrb[0].mxu0
    %2067 = vdwg.mxu0
    %2068 = vmatprep.subr.bf16.mxu0 %v1932
    %2069 = vmatpush1.bf16.msra.mxu0 %v1931
    %2070 = vmatprep.subr.bf16.mxu0 %v1934
    %2071 = vmatpush1.bf16.msra.mxu0 %v1933
    %2072 = vmatprep.subr.bf16.mxu0 %v1936
    %2073 = vmatpush1.bf16.msra.mxu0 %v1935
    %2074 = vmatprep.subr.bf16.mxu0 %v1938
    %2075 = vmatpush1.bf16.msra.mxu0 %v1937
    %2076 = vmatprep.subr.bf16.mxu0 %v1940
    %2077 = vmatpush1.bf16.msra.mxu0 %v1939
    %2078 = vmatprep.subr.bf16.mxu0 %v1942
    %2079 = vmatpush1.bf16.msra.mxu0 %v1941
    %2080 = vmatprep.subr.bf16.mxu0 %v1944
    %2081 = vmatpush1.bf16.msra.mxu0 %v1943
    %2082 = vmatprep.subr.bf16.mxu0 %v1946
    %2083 = vmatpush1.bf16.msra.mxu0 %v1945
    %2084 = vmatprep.subr.bf16.mxu0 %v1948
    %2085 = vmatpush1.bf16.msra.mxu0 %v1947
    %2086 = vmatprep.subr.bf16.mxu0 %v1950
    %2087 = vmatpush1.bf16.msra.mxu0 %v1949
    %2088 = vmatprep.subr.bf16.mxu0 %v1952
    %2089 = vmatpush1.bf16.msra.mxu0 %v1951
    %2090 = vmatprep.subr.bf16.mxu0 %v1954
    %2091 = vmatpush1.bf16.msra.mxu0 %v1953
    %2092 = vmatprep.subr.bf16.mxu0 %v1956
    %2093 = vmatpush1.bf16.msra.mxu0 %v1955
    %2094 = vmatprep.subr.bf16.mxu0 %v1958
    %2095 = vmatpush1.bf16.msra.mxu0 %v1957
    %2096 = vmatprep.subr.bf16.mxu0 %v1960
    %2097 = vmatpush1.bf16.msra.mxu0 %v1959
    %2098 = vmatprep.subr.bf16.mxu0 %v1962
    %2099 = vmatpush1.bf16.msra.mxu0 %v1961
    %2100 = vmatprep.mubr.bf16.mxu0 %v1630
    %2101 = vmatmul.mubr.bf16.gmra.mrb[0].mxu0 %v1629
    %v2102 = vpop.f32.mrb[0].mxu0
    %v2103 = vadd.f32 %v2062, %v2102
    %v2104 = vpop.f32.mrb[0].mxu0
    %v2105 = vadd.f32 %v2064, %v2104
    %v2106 = vpop.f32.mrb[0].mxu0
    %v2107 = vpop.f32.mrb[0].mxu0
    %2108 = vdwg.mxu0
    %vm2109 = vcmp.gt.f32.partialorder %v2103, 0.0
    %vm2110 = vcmp.gt.f32.partialorder %v2105, 0.0
    %v2111 = vmul.f32 %v2103, 0.01
    %v2112 = vmul.f32 %v2105, 0.01
    %v2113 = vsel %vm2109, %v2103, %v2111
    %v2114 = vsel %vm2110, %v2105, %v2112
    %v2115 = vld [vmem:[%s5] sm:$0x3]
    %v2117 = vlaneseq
    %v2118 = vshrl.u32 %v2117, 7
    %v2119 = vsub.s32 0, %v2118
    %v2120 = vrot.slane %v2115, %v2119
    %v2121 = vlaneseq
    %v2122 = vshrl.u32 %v2121, 7
    %v2123 = vsub.s32 1, %v2122
    %v2124 = vrot.slane %v2115, %v2123
    %v2127 = vmul.f32 %v2113, %v2120
    %v2128 = vmul.f32 %v2114, %v2124
    %v2129 = vadd.f32 %v2127, %v2128
    %2130 = vadd.xlane.f32.xlu0 %v2129
    %v2131 = vpop.xlane.xlu0 %2130
    %v2132 = vld [vmem:[#allocation2] sm:$0x1]
    %v2134 = vlaneseq
    %v2135 = vshrl.u32 %v2134, 7
    %v2136 = vsub.s32 0, %v2135
    %v2137 = vrot.slane %v2132, %v2136
    %v2139 = vadd.f32 %v2131, %v2137
    %v2140 = vsub.f32 0.0, %v2139
    %v2141 = vmin.f32 %v2140, 30.0
    %v2142 = vmul.f32 %v2141, 1.442695
    %v2143 = vpow.pop %v2142
    %v2144 = vadd.f32 %v2143, 1.0
    %v2145 = vrcp.pop %v2144
    %vm2146 = vcmask 7168
    %2147 = vst.msk [vmem:[%s7] sm:$0xff] %vm2146, %v2145
    // Predicated region
    $region38: #{discriminator_forward.1} parent=1 // pred_check
      _
    $region39: #{discriminator_forward.1} parent=1 // pred_check_branch
      %2149 = sbr.rel (0) target = $region41
    $region40: #{discriminator_forward.1} parent=1 // pred_region
      _
    $region41: #{discriminator_forward.1} parent=1 // pred_fallthru
      _
    // Predicated region
    $region42: #{discriminator_forward.1} parent=1 // pred_check
      _
    $region43: #{discriminator_forward.1} parent=1 // pred_check_branch
      %2151 = sbr.rel (0) target = $region45
    $region44: #{discriminator_forward.1} parent=1 // pred_region
      _
    $region45: #{discriminator_forward.1} parent=1 // pred_fallthru
      _
    %2152 = vsyncpa [#allocation4], 1
    %2153 = vsyncpa [#allocation6], 1

</llo_original>
